<compile_context>
chip_gen: v7x
topology: tpu7x:2x2x1
jax: 0.10.0
libtpu: 0.0.40
codegen_flags: <defaults>
</compile_context>

<pallas_src>
import jax
import jax.numpy as jnp
from jax.experimental import pallas as pl
from jax.experimental.pallas import tpu as pltpu


# ----------------------------------------------------------------------------
# Fused Pallas kernel: edge MLP (via gathered node projections) + coord MLP +
# fused segment aggregation + node MLP / segment-mean finalize
# ----------------------------------------------------------------------------

def _fused_gmn_kernel(rows_lane_ref, rc_ref, cdr_ref,
                      hr_ref, hc_ref, w1rad_ref, eb1_ref,
                      ew2_ref, eb2_ref, cw1_ref, cb1_ref, cw2t_ref,
                      invdeg_ref, h_ref,
                      nw1hx_ref, nw1a_ref, nb1_ref, nw2_ref, nb2_ref,
                      hout_ref, f_ref,
                      acc_ref, feat_ref):
    t = pl.program_id(0)
    n_nodes = acc_ref.shape[0]
    hdim = hout_ref.shape[1]
    tm = feat_ref.shape[0]

    @pl.when(t == 0)
    def _init():
        acc_ref[...] = jnp.zeros_like(acc_ref)

    # ---- one-hot gather matrices (edges on sublanes, nodes on lanes) -------
    rc = rc_ref[...]                                              # [TM, 2] int32
    rows_s = rc[:, 0:1]                                           # [TM, 1]
    cols_s = rc[:, 1:2]                                           # [TM, 1]
    node_lane = jax.lax.broadcasted_iota(jnp.int32, (tm, n_nodes), 1)
    a_row_t = (node_lane == rows_s).astype(jnp.float32).astype(jnp.bfloat16)
    a_col_t = (node_lane == cols_s).astype(jnp.float32).astype(jnp.bfloat16)

    cdr = cdr_ref[...]                                            # [TM, 4] f32
    cdiff = cdr[:, 0:3]
    radial = cdr[:, 3:4]

    # ---- edge MLP layer 1 (decomposed): gather pre-projected node features -
    # z = h[row] @ W1_row + h[col] @ W1_col + radial * W1_rad + b1
    z = (jnp.dot(a_row_t, hr_ref[...], preferred_element_type=jnp.float32)
         + jnp.dot(a_col_t, hc_ref[...], preferred_element_type=jnp.float32)
         + radial * w1rad_ref[...]
         + eb1_ref[...])
    z = jnp.maximum(z, 0.0)
    efeat = jnp.maximum(
        jnp.dot(z.astype(jnp.bfloat16), ew2_ref[...],
                preferred_element_type=jnp.float32) + eb2_ref[...],
        0.0)                                                      # [TM, H] f32

    # ---- coord MLP: Linear(H,H) -> ReLU -> Linear(H,1, no bias) ------------
    c = jnp.maximum(
        jnp.dot(efeat.astype(jnp.bfloat16), cw1_ref[...],
                preferred_element_type=jnp.float32) + cb1_ref[...],
        0.0)
    # final (H -> 1) layer as VPU multiply + lane reduce (weight is [1, H])
    scale = jnp.sum(c * cw2t_ref[...], axis=1, keepdims=True)     # [TM, 1]
    trans = jnp.clip(cdiff * scale, -100.0, 100.0)                # [TM, 3]

    # ---- fused segment-sum aggregation: ONE [N,TM] x [TM,H+3] matmul -------
    feat_ref[:, 0:hdim] = efeat.astype(jnp.bfloat16)
    feat_ref[:, hdim:] = trans.astype(jnp.bfloat16)
    rows_l = rows_lane_ref[...]                                   # [1, TM] int32
    node_sub = jax.lax.broadcasted_iota(jnp.int32, (n_nodes, tm), 0)
    a_agg = (node_sub == rows_l).astype(jnp.float32).astype(jnp.bfloat16)
    acc_ref[...] += jnp.dot(a_agg, feat_ref[...],
                            preferred_element_type=jnp.float32)   # [N, H+3]

    # ---- finalize: segment mean * coords_weight, node MLP + residual -------
    @pl.when(t == pl.num_programs(0) - 1)
    def _finalize():
        acc = acc_ref[...]
        agg = acc[:, 0:hdim]                                      # [N, H]
        f_ref[...] = acc[:, hdim:] * invdeg_ref[...]              # [N, 3]
        hh = h_ref[...]                                           # [N, H]
        tn = (jnp.dot(hh.astype(jnp.bfloat16), nw1hx_ref[...],
                      preferred_element_type=jnp.float32)
              + jnp.dot(agg.astype(jnp.bfloat16), nw1a_ref[...],
                        preferred_element_type=jnp.float32)
              + nb1_ref[...])
        tn = jnp.maximum(tn, 0.0)
        hout_ref[...] = (hh
                         + jnp.dot(tn.astype(jnp.bfloat16), nw2_ref[...],
                                   preferred_element_type=jnp.float32)
                         + nb2_ref[...])


# ----------------------------------------------------------------------------
# Plain-JAX glue: rigid-object updates (tiny K, data-dependent gather/scatter)
# ----------------------------------------------------------------------------

def _mlp2(x, w1, b1, w2, b2):
    t = jnp.maximum(x @ w1 + b1, 0.0)
    return t @ w2 + b2


def _l2_normalize(a, axis=-1, eps=1e-12):
    n = jnp.sqrt(jnp.sum(a * a, axis=axis, keepdims=True))
    return a / jnp.maximum(n, eps)


def _rotation_matrix(theta, d):
    dx, dy, dz = d[..., 0], d[..., 1], d[..., 2]
    c, s = jnp.cos(theta), jnp.sin(theta)
    ret = jnp.stack(
        [c + (1 - c) * dx * dx, (1 - c) * dx * dy - s * dz, (1 - c) * dx * dz + s * dy,
         (1 - c) * dx * dy + s * dz, c + (1 - c) * dy * dy, (1 - c) * dy * dz - s * dx,
         (1 - c) * dx * dz - s * dy, (1 - c) * dy * dz + s * dx, c + (1 - c) * dz * dz],
        axis=-1)
    return ret.reshape(-1, 3, 3)


def _update_isolated(p, x, v, f, h, idx):
    _x, _v, _f, _h = x[idx], v[idx], f[idx], h[idx]
    _a = _f / 1.0
    scale = _mlp2(_h, p['cvel_w1'], p['cvel_b1'], p['cvel_w2'], p['cvel_b2'])
    _v = scale * _v + _a
    _x = _x + _v
    return x.at[idx].set(_x), v.at[idx].set(_v)


def _update_stick(p, x, v, f, h, node_index):
    id1, id2 = node_index[:, 0], node_index[:, 1]
    _x1, _v1, _f1, _h1 = x[id1], v[id1], f[id1], h[id1]
    _x2, _v2, _f2, _h2 = x[id2], v[id2], f[id2], h[id2]
    _x0, _v0 = (_x1 + _x2) / 2.0, (_v1 + _v2) / 2.0

    def apply_f(cur_f):
        X = cur_f[:, :, None]                                             # [K,3,1]
        inv = jnp.einsum('bij,bjk->bik', jnp.transpose(X, (0, 2, 1)), X)  # [K,1,1]
        inv = _l2_normalize(inv.reshape(-1, 1), axis=-1)
        msg = _mlp2(inv, p['fstick_w1'], p['fstick_b1'], p['fstick_w2'], p['fstick_b2'])
        return jnp.einsum('bij,bjk->bik', X, msg[:, :, None])[..., 0]     # [K,3]

    _a0 = (apply_f(_f1) + apply_f(_f2)) / 2.0
    J = (jnp.sum((_x1 - _x0) ** 2, axis=-1, keepdims=True)
         + jnp.sum((_x2 - _x0) ** 2, axis=-1, keepdims=True))
    _beta = jnp.cross(_x1 - _x0, _f1) / J + jnp.cross(_x2 - _x0, _f2) / J
    _r, _vr = (_x1 - _x2) / 2.0, (_v1 - _v2) / 2.0
    _w = jnp.cross(_l2_normalize(_r), _vr) / jnp.maximum(
        jnp.linalg.norm(_r, axis=-1, keepdims=True), 1e-5)
    _h_c = (_mlp2(_h1, p['center_w1'], p['center_b1'], p['center_w2'], p['center_b2'])
            + _mlp2(_h2, p['center_w1'], p['center_b1'], p['center_w2'], p['center_b2']))
    _w = _mlp2(_h_c, p['cwvel_w1'], p['cwvel_b1'], p['cwvel_w2'], p['cwvel_b2']) * _w + _beta
    _v0 = _mlp2(_h_c, p['cvel_w1'], p['cvel_b1'], p['cvel_w2'], p['cvel_b2']) * _v0 + _a0
    _x0 = _x0 + _v0
    _theta = jnp.linalg.norm(_w, axis=-1)
    rot = _rotation_matrix(_theta, _l2_normalize(_w))
    _r = jnp.einsum('bij,bjk->bik', rot, _r[:, :, None])[..., 0]
    _x1n, _x2n = _x0 + _r, _x0 - _r
    _v1n, _v2n = _v0 + jnp.cross(_w, _r), _v0 + jnp.cross(_w, -_r)
    x = x.at[id1].set(_x1n).at[id2].set(_x2n)
    v = v.at[id1].set(_v1n).at[id2].set(_v2n)
    return x, v


def _update_hinge(p, x, v, f, h, node_index):
    id0, id1, id2 = node_index[:, 0], node_index[:, 1], node_index[:, 2]
    _x0, _v0, _f0, _h0 = x[id0], v[id0], f[id0], h[id0]
    _x1, _v1, _f1, _h1 = x[id1], v[id1], f[id1], h[id1]
    _x2, _v2, _f2, _h2 = x[id2], v[id2], f[id2], h[id2]

    def apply_f(cx, cv, cf):
        X = jnp.stack((cf, cx - _x0, cv - _v0), axis=-1)                   # [K,3,3]
        inv = jnp.einsum('bij,bjk->bik', jnp.transpose(X, (0, 2, 1)), X)
        inv = _l2_normalize(inv.reshape(-1, 9), axis=-1)
        msg = _mlp2(inv, p['fhinge_w1'], p['fhinge_b1'], p['fhinge_w2'], p['fhinge_b2'])
        return jnp.einsum('bij,bjk->bik', X, msg[:, :, None])[..., 0]

    _a0 = (apply_f(_x0, _v0, _f0) + apply_f(_x1, _v1, _f1) + apply_f(_x2, _v2, _f2)) / 3.0

    def apply_g(cx, cf):
        return jnp.cross(cx - _x0, cf - _a0) / jnp.sum((cx - _x0) ** 2, axis=-1,
                                                       keepdims=True)

    _beta1, _beta2 = apply_g(_x1, _f1), apply_g(_x2, _f2)

    def compute_c(cx, cv):
        r, rv = cx - _x0, cv - _v0
        w = jnp.cross(_l2_normalize(r), rv) / jnp.maximum(
            jnp.linalg.norm(r, axis=-1, keepdims=True), 1e-5)
        return r, w

    _r1, _w1 = compute_c(_x1, _v1)
    _r2, _w2 = compute_c(_x2, _v2)
    _h_c = (_mlp2(_h1, p['center_w1'], p['center_b1'], p['center_w2'], p['center_b2'])
            + _mlp2(_h2, p['center_w1'], p['center_b1'], p['center_w2'], p['center_b2']))
    _v0 = _mlp2(_h_c, p['cvel_w1'], p['cvel_b1'], p['cvel_w2'], p['cvel_b2']) * _v0 + _a0
    _x0 = _x0 + _v0

    def update_c(w, beta, r, hh):
        w = _mlp2(hh, p['cwvel_w1'], p['cwvel_b1'], p['cwvel_w2'], p['cwvel_b2']) * w + beta
        theta = jnp.linalg.norm(w, axis=-1)
        rot = _rotation_matrix(theta, _l2_normalize(w))
        r = jnp.einsum('bij,bjk->bik', rot, r[:, :, None])[..., 0]
        return r, w

    _r1, _w1 = update_c(_w1, _beta1, _r1, _h1)
    _r2, _w2 = update_c(_w2, _beta2, _r2, _h2)
    _x1n, _x2n = _x0 + _r1, _x0 + _r2
    _v1n, _v2n = _v0 + jnp.cross(_w1, _r1), _v0 + jnp.cross(_w2, _r2)
    x = x.at[id0].set(_x0).at[id1].set(_x1n).at[id2].set(_x2n)
    v = v.at[id0].set(_v0).at[id1].set(_v1n).at[id2].set(_v2n)
    return x, v


# ----------------------------------------------------------------------------
# Forward pass
# ----------------------------------------------------------------------------

def gmn_forward(p, h, edge_index, x, v, cfg, coords_weight=1.0):
    N, H = h.shape
    row = edge_index[0].astype(jnp.int32)
    col = edge_index[1].astype(jnp.int32)
    M = int(row.shape[0])

    # Edge tile size: single tile for small M, 2048-wide tiles otherwise.
    # Per-step compute is tiny at H=32 (grid-step-overhead bound), so the
    # biggest tile that comfortably fits VMEM wins.
    TM = min(2048, ((M + 127) // 128) * 128)
    Mp = ((M + TM - 1) // TM) * TM
    pad = Mp - M
    n_tiles = Mp // TM

    # ---- tiny per-call XLA precompute --------------------------------------
    cdiff = x[row] - x[col]                                       # [M, 3]
    radial = jnp.sum(cdiff * cdiff, axis=1, keepdims=True)        # [M, 1]
    cdr = jnp.pad(jnp.concatenate([cdiff, radial], axis=1), ((0, pad), (0, 0)))

    # padded edges get sentinel id N -> their one-hot row/column is all-zero
    rows_p = jnp.pad(row, (0, pad), constant_values=N)
    cols_p = jnp.pad(col, (0, pad), constant_values=N)
    rows_lane = rows_p.reshape(1, Mp)                             # edges on lanes
    rc_sub = jnp.stack([rows_p, cols_p], axis=1)                  # [Mp, 2], edges on sublanes

    # loop-invariant node-side projections of edge-MLP layer 1: the [M, 2H+1]
    # ein stream is replaced by an [M, 2] int32 index stream + in-kernel gather.
    hr_proj = (h @ p['edge_w1_row']).astype(jnp.bfloat16)         # [N, H]
    hc_proj = (h @ p['edge_w1_col']).astype(jnp.bfloat16)         # [N, H]

    # 1/max(deg,1) * coords_weight (segment-mean denominator), precomputed
    deg = jnp.zeros((N,), jnp.float32).at[row].add(1.0)
    invdeg_cw = (coords_weight / jnp.maximum(deg, 1.0)).reshape(N, 1)

    const = lambda shape: pl.BlockSpec(shape, lambda t: (0, 0))

    grid_spec = pltpu.PrefetchScalarGridSpec(
        num_scalar_prefetch=0,
        grid=(n_tiles,),
        in_specs=[
            pl.BlockSpec((1, TM), lambda t: (0, t)),   # rows_lane  (aggregation)
            pl.BlockSpec((TM, 2), lambda t: (t, 0)),   # rc_sub     (gather)
            pl.BlockSpec((TM, 4), lambda t: (t, 0)),   # cdiff | radial
            const((N, H)),                             # hr_proj (bf16)
            const((N, H)),                             # hc_proj (bf16)
            const((1, H)),                             # edge_w1_rad
            const((1, H)),                             # edge_b1
            const((H, H)),                             # edge_w2 (bf16)
            const((1, H)),                             # edge_b2
            const((H, H)),                             # coord_w1 (bf16)
            const((1, H)),                             # coord_b1
            const((1, H)),                             # coord_w2t
            const((N, 1)),                             # invdeg_cw
            const((N, H)),                             # h
            const((H, H)),                             # node_w1_hx (bf16, pre-summed)
            const((H, H)),                             # node_w1_agg (bf16)
            const((1, H)),                             # node_b1
            const((H, H)),                             # node_w2 (bf16)
            const((1, H)),                             # node_b2
        ],
        out_specs=(
            const((N, H)),                             # h_out
            const((N, 3)),                             # f
        ),
        scratch_shapes=[
            pltpu.VMEM((N, H + 3), jnp.float32),       # fused [agg | f_sum] accumulator
            pltpu.VMEM((TM, H + 3), jnp.bfloat16),     # packed [efeat | trans] operand
        ],
    )

    h_out, f = pl.pallas_call(
        _fused_gmn_kernel,
        out_shape=(jax.ShapeDtypeStruct((N, H), jnp.float32),
                   jax.ShapeDtypeStruct((N, 3), jnp.float32)),
        grid_spec=grid_spec,
        compiler_params=pltpu.CompilerParams(
            # edge axis accumulates into resident blocks -> arbitrary
            dimension_semantics=("arbitrary",),
            vmem_limit_bytes=48 * 1024 * 1024),
    )(rows_lane, rc_sub, cdr,
      hr_proj, hc_proj, p['edge_w1_rad'], p['edge_b1'],
      p['edge_w2'], p['edge_b2'],
      p['coord_w1'], p['coord_b1'], p['coord_w2t'],
      invdeg_cw, h,
      p['node_w1_hx'], p['node_w1_agg'], p['node_b1'], p['node_w2'], p['node_b2'])

    # --- rigid-object updates (K tiny; data-dependent gather/scatter) -------
    # TODO(synk): kept in plain JAX glue; K is tiny and indices are data-dependent.
    for typ, idx in cfg.items():
        if typ == 'Isolated':
            x, v = _update_isolated(p, x, v, f, h, idx)
        elif typ == 'Stick':
            x, v = _update_stick(p, x, v, f, h, idx)
        elif typ == 'Hinge':
            x, v = _update_hinge(p, x, v, f, h, idx)
        else:
            raise NotImplementedError('Unknown object type:', typ)

    return h_out, x, v, None


# ----------------------------------------------------------------------------
# Deterministic parameter init (weights stored as [in, out]; bias as [1, out]).
# Pre-split / pre-fused / pre-cast (bf16 for MXU-only weights) at init time.
# ----------------------------------------------------------------------------

def _init_linear(key, din, dout, bias=True):
    kw, kb = jax.random.split(key)
    bound = 1.0 / (din ** 0.5)
    w = jax.random.uniform(kw, (din, dout), jnp.float32, -bound, bound)
    b = jax.random.uniform(kb, (1, dout), jnp.float32, -bound, bound) if bias else None
    return w, b


def init_params(key, H):
    ks = jax.random.split(key, 16)
    p = {}
    edge_w1, p['edge_b1'] = _init_linear(ks[0], 2 * H + 1, H)
    # edge layer-1 pre-split: row block / col block (wrapper projections, f32),
    # radial row (VPU outer product in-kernel, f32)
    p['edge_w1_row'] = edge_w1[:H]
    p['edge_w1_col'] = edge_w1[H:2 * H]
    p['edge_w1_rad'] = edge_w1[2 * H:2 * H + 1]
    edge_w2, p['edge_b2'] = _init_linear(ks[1], H, H)
    p['edge_w2'] = edge_w2.astype(jnp.bfloat16)

    node_w1, p['node_b1'] = _init_linear(ks[2], 3 * H, H)
    # node MLP input is concat([h, h, agg]) (others=h, x=h) -> fuse the two
    # identical-operand blocks of the 3H-wide layer-1 weight.
    p['node_w1_hx'] = (node_w1[:H] + node_w1[H:2 * H]).astype(jnp.bfloat16)
    p['node_w1_agg'] = node_w1[2 * H:3 * H].astype(jnp.bfloat16)
    node_w2, p['node_b2'] = _init_linear(ks[3], H, H)
    p['node_w2'] = node_w2.astype(jnp.bfloat16)

    p['cvel_w1'], p['cvel_b1'] = _init_linear(ks[4], H, H)
    p['cvel_w2'], p['cvel_b2'] = _init_linear(ks[5], H, 1)
    p['cwvel_w1'], p['cwvel_b1'] = _init_linear(ks[6], H, H)
    p['cwvel_w2'], p['cwvel_b2'] = _init_linear(ks[7], H, 1)
    p['center_w1'], p['center_b1'] = _init_linear(ks[8], H, H)
    p['center_w2'], p['center_b2'] = _init_linear(ks[9], H, H)
    p['fstick_w1'], p['fstick_b1'] = _init_linear(ks[10], 1, H)
    p['fstick_w2'], p['fstick_b2'] = _init_linear(ks[11], H, 1)
    p['fhinge_w1'], p['fhinge_b1'] = _init_linear(ks[12], 9, H)
    p['fhinge_w2'], p['fhinge_b2'] = _init_linear(ks[13], H, 3)
    coord_w1, p['coord_b1'] = _init_linear(ks[14], H, H)
    p['coord_w1'] = coord_w1.astype(jnp.bfloat16)
    # final coord layer: xavier_uniform gain=0.001, no bias; stored transposed [1, H]
    xb = 0.001 * (6.0 / (H + 1)) ** 0.5
    coord_w2 = jax.random.uniform(ks[15], (H, 1), jnp.float32, -xb, xb)
    p['coord_w2t'] = coord_w2.T
    return p


# ----------------------------------------------------------------------------
# Pure-JAX f32 reference for the kernel-covered part (edge/coord/node MLPs + f)
# ----------------------------------------------------------------------------

def _reference_h_f(p, h, edge_index, x, coords_weight=1.0):
    N, H = h.shape
    row, col = edge_index[0], edge_index[1]
    f32 = lambda a: a.astype(jnp.float32)
    cdiff = x[row] - x[col]
    radial = jnp.sum(cdiff * cdiff, axis=1, keepdims=True)
    z = jnp.maximum(h[row] @ p['edge_w1_row'] + h[col] @ p['edge_w1_col']
                    + radial * p['edge_w1_rad'] + p['edge_b1'], 0.0)
    efeat = jnp.maximum(z @ f32(p['edge_w2']) + p['edge_b2'], 0.0)
    c = jnp.maximum(efeat @ f32(p['coord_w1']) + p['coord_b1'], 0.0)
    scale = jnp.sum(c * p['coord_w2t'], axis=1, keepdims=True)
    trans = jnp.clip(cdiff * scale, -100.0, 100.0)
    deg = jnp.zeros((N,), jnp.float32).at[row].add(1.0)
    f = (jnp.zeros((N, 3), jnp.float32).at[row].add(trans)
         / jnp.maximum(deg, 1.0)[:, None]) * coords_weight
    agg = jnp.zeros((N, H), jnp.float32).at[row].add(efeat)
    tn = jnp.maximum(h @ f32(p['node_w1_hx']) + agg @ f32(p['node_w1_agg'])
                     + p['node_b1'], 0.0)
    h_out = h + tn @ f32(p['node_w2']) + p['node_b2']
    return h_out, f


if __name__ == "__main__":
    key = jax.random.PRNGKey(0)
    H, N = 32, 16          # input_nf = output_nf = hidden_nf = 32; 16 nodes
    kp, kh, kx, kv = jax.random.split(key, 4)
    params = init_params(kp, H)

    h = jax.random.normal(kh, (N, H), jnp.float32)
    x = jax.random.normal(kx, (N, 3), jnp.float32)
    v = jax.random.normal(kv, (N, 3), jnp.float32)

    # 32 directed edges: (i, i+1 mod N) and (i, i+2 mod N)
    src = jnp.concatenate([jnp.arange(N), jnp.arange(N)])
    dst = jnp.concatenate([(jnp.arange(N) + 1) % N, (jnp.arange(N) + 2) % N])
    edge_index = jnp.stack([src, dst]).astype(jnp.int32)         # [2, 32]

    cfg = {
        'Isolated': jnp.array([0, 1, 2, 3], dtype=jnp.int32),               # [4]
        'Stick':    jnp.array([[4, 5], [6, 7]], dtype=jnp.int32),           # [2, 2]
        'Hinge':    jnp.array([[8, 9, 10], [11, 12, 13]], dtype=jnp.int32), # [2, 3]
    }

    h_out, x_out, v_out, _ = gmn_forward(params, h, edge_index, x, v, cfg)
    jax.block_until_ready((h_out, x_out, v_out))

    assert h_out.shape == (N, H) and x_out.shape == (N, 3) and v_out.shape == (N, 3)
    assert bool(jnp.all(jnp.isfinite(h_out))) and bool(jnp.all(jnp.isfinite(x_out)))
    assert bool(jnp.all(jnp.isfinite(v_out)))

    # loose check vs the f32 reference (kernel uses bf16 MXU operands)
    h_ref, f_ref = _reference_h_f(params, h, edge_index, x)
    _, _, _, _ = gmn_forward(params, h, edge_index, x, v, cfg)  # warm second call
    deg = jnp.zeros((N,), jnp.float32).at[edge_index[0]].add(1.0)
    assert float(jnp.max(jnp.abs(h_out - h_ref))) < 1e-1
    print("KERNEL_OK")
</pallas_src>

<mosaic_0001>
module attributes {stable_mosaic.version = 11 : i64} {
  func.func @_fused_gmn_kernel(%arg0: i32, %arg1: memref<1x128xi32, #tpu.memory_space<vmem>>, %arg2: memref<128x2xi32, #tpu.memory_space<vmem>>, %arg3: memref<128x4xf32, #tpu.memory_space<vmem>>, %arg4: memref<16x32xbf16, #tpu.memory_space<vmem>>, %arg5: memref<16x32xbf16, #tpu.memory_space<vmem>>, %arg6: memref<1x32xf32, #tpu.memory_space<vmem>>, %arg7: memref<1x32xf32, #tpu.memory_space<vmem>>, %arg8: memref<32x32xbf16, #tpu.memory_space<vmem>>, %arg9: memref<1x32xf32, #tpu.memory_space<vmem>>, %arg10: memref<32x32xbf16, #tpu.memory_space<vmem>>, %arg11: memref<1x32xf32, #tpu.memory_space<vmem>>, %arg12: memref<1x32xf32, #tpu.memory_space<vmem>>, %arg13: memref<16x1xf32, #tpu.memory_space<vmem>>, %arg14: memref<16x32xf32, #tpu.memory_space<vmem>>, %arg15: memref<32x32xbf16, #tpu.memory_space<vmem>>, %arg16: memref<32x32xbf16, #tpu.memory_space<vmem>>, %arg17: memref<1x32xf32, #tpu.memory_space<vmem>>, %arg18: memref<32x32xbf16, #tpu.memory_space<vmem>>, %arg19: memref<1x32xf32, #tpu.memory_space<vmem>>, %arg20: memref<16x32xf32, #tpu.memory_space<vmem>>, %arg21: memref<16x3xf32, #tpu.memory_space<vmem>>, %arg22: memref<16x35xf32, #tpu.memory_space<vmem>>, %arg23: memref<128x35xbf16, #tpu.memory_space<vmem>>) attributes {dimension_semantics = [#tpu.dimension_semantics<arbitrary>], iteration_bounds = array<i64: 1>, scalar_prefetch = 0 : i64, scratch_operands = 2 : i64, tpu.core_type = #tpu.core_type<tc>, window_params = [{transform_indices = @transform_0, window_bounds = array<i64: 1, 128>}, {transform_indices = @transform_1, window_bounds = array<i64: 128, 2>}, {transform_indices = @transform_2, window_bounds = array<i64: 128, 4>}, {pipeline_mode = #tpu.pipeline_mode<synchronous>, transform_indices = @transform_3, window_bounds = array<i64: 16, 32>}, {pipeline_mode = #tpu.pipeline_mode<synchronous>, transform_indices = @transform_4, window_bounds = array<i64: 16, 32>}, {pipeline_mode = #tpu.pipeline_mode<synchronous>, transform_indices = @transform_5, window_bounds = array<i64: 1, 32>}, {pipeline_mode = #tpu.pipeline_mode<synchronous>, transform_indices = @transform_6, window_bounds = array<i64: 1, 32>}, {pipeline_mode = #tpu.pipeline_mode<synchronous>, transform_indices = @transform_7, window_bounds = array<i64: 32, 32>}, {pipeline_mode = #tpu.pipeline_mode<synchronous>, transform_indices = @transform_8, window_bounds = array<i64: 1, 32>}, {pipeline_mode = #tpu.pipeline_mode<synchronous>, transform_indices = @transform_9, window_bounds = array<i64: 32, 32>}, {pipeline_mode = #tpu.pipeline_mode<synchronous>, transform_indices = @transform_10, window_bounds = array<i64: 1, 32>}, {pipeline_mode = #tpu.pipeline_mode<synchronous>, transform_indices = @transform_11, window_bounds = array<i64: 1, 32>}, {pipeline_mode = #tpu.pipeline_mode<synchronous>, transform_indices = @transform_12, window_bounds = array<i64: 16, 1>}, {pipeline_mode = #tpu.pipeline_mode<synchronous>, transform_indices = @transform_13, window_bounds = array<i64: 16, 32>}, {pipeline_mode = #tpu.pipeline_mode<synchronous>, transform_indices = @transform_14, window_bounds = array<i64: 32, 32>}, {pipeline_mode = #tpu.pipeline_mode<synchronous>, transform_indices = @transform_15, window_bounds = array<i64: 32, 32>}, {pipeline_mode = #tpu.pipeline_mode<synchronous>, transform_indices = @transform_16, window_bounds = array<i64: 1, 32>}, {pipeline_mode = #tpu.pipeline_mode<synchronous>, transform_indices = @transform_17, window_bounds = array<i64: 32, 32>}, {pipeline_mode = #tpu.pipeline_mode<synchronous>, transform_indices = @transform_18, window_bounds = array<i64: 1, 32>}, {pipeline_mode = #tpu.pipeline_mode<synchronous>, transform_indices = @transform_19, window_bounds = array<i64: 16, 32>}, {pipeline_mode = #tpu.pipeline_mode<synchronous>, transform_indices = @transform_20, window_bounds = array<i64: 16, 3>}]} {
    %c0_i32 = arith.constant 0 : i32
    %0 = arith.cmpi eq, %arg0, %c0_i32 : i32
    %1 = arith.extui %0 : i1 to i32
    %c0_i32_0 = arith.constant 0 : i32
    %2 = arith.cmpi ne, %1, %c0_i32_0 : i32
    scf.if %2 {
      %cst_45 = arith.constant 0.000000e+00 : f32
      %81 = vector.broadcast %cst_45 : f32 to vector<16x35xf32>
      %c0_46 = arith.constant 0 : index
      %c0_47 = arith.constant 0 : index
      %82 = vector.load %arg22[%c0_46, %c0_47] : memref<16x35xf32, #tpu.memory_space<vmem>>, vector<16x35xf32>
      tpu.vector_store %arg22[%c0_46, %c0_47], %81 {strides = array<i32>} : memref<16x35xf32, #tpu.memory_space<vmem>>, vector<16x35xf32>,
    } else {
    }
    %c0 = arith.constant 0 : index
    %c0_1 = arith.constant 0 : index
    %3 = vector.load %arg2[%c0, %c0_1] : memref<128x2xi32, #tpu.memory_space<vmem>>, vector<128x2xi32>
    %4 = vector.extract_strided_slice %3 {offsets = [0, 0], sizes = [128, 1], strides = [1, 1]} : vector<128x2xi32> to vector<128x1xi32>
    %5 = vector.extract_strided_slice %3 {offsets = [0, 1], sizes = [128, 1], strides = [1, 1]} : vector<128x2xi32> to vector<128x1xi32>
    %6 = tpu.iota {dimensions = array<i32: 1>} : vector<128x16xi32>
    %7 = vector.broadcast %4 : vector<128x1xi32> to vector<128x16xi32>
    %8 = arith.cmpi eq, %6, %7 : vector<128x16xi32>
    %9 = arith.extui %8 : vector<128x16xi1> to vector<128x16xi32>
    %10 = arith.sitofp %9 : vector<128x16xi32> to vector<128x16xf32>
    %11 = arith.truncf %10 : vector<128x16xf32> to vector<128x16xbf16>
    %12 = vector.broadcast %5 : vector<128x1xi32> to vector<128x16xi32>
    %13 = arith.cmpi eq, %6, %12 : vector<128x16xi32>
    %14 = arith.extui %13 : vector<128x16xi1> to vector<128x16xi32>
    %15 = arith.sitofp %14 : vector<128x16xi32> to vector<128x16xf32>
    %16 = arith.truncf %15 : vector<128x16xf32> to vector<128x16xbf16>
    %c0_2 = arith.constant 0 : index
    %c0_3 = arith.constant 0 : index
    %17 = vector.load %arg3[%c0_2, %c0_3] : memref<128x4xf32, #tpu.memory_space<vmem>>, vector<128x4xf32>
    %18 = vector.extract_strided_slice %17 {offsets = [0, 0], sizes = [128, 3], strides = [1, 1]} : vector<128x4xf32> to vector<128x3xf32>
    %19 = vector.extract_strided_slice %17 {offsets = [0, 3], sizes = [128, 1], strides = [1, 1]} : vector<128x4xf32> to vector<128x1xf32>
    %c0_4 = arith.constant 0 : index
    %c0_5 = arith.constant 0 : index
    %20 = vector.load %arg4[%c0_4, %c0_5] : memref<16x32xbf16, #tpu.memory_space<vmem>>, vector<16x32xbf16>
    %cst = arith.constant dense<0.000000e+00> : vector<128x32xf32>
    %21 = tpu.matmul %11, %20, %cst {dimension_numbers = #tpu.dot_dimension_numbers<[1], [0], [0], [1], [0, 0, 1, 1], [], []>} : vector<128x16xbf16>, vector<16x32xbf16>, vector<128x32xf32> -> vector<128x32xf32>
    %c0_6 = arith.constant 0 : index
    %c0_7 = arith.constant 0 : index
    %22 = vector.load %arg5[%c0_6, %c0_7] : memref<16x32xbf16, #tpu.memory_space<vmem>>, vector<16x32xbf16>
    %cst_8 = arith.constant dense<0.000000e+00> : vector<128x32xf32>
    %23 = tpu.matmul %16, %22, %cst_8 {dimension_numbers = #tpu.dot_dimension_numbers<[1], [0], [0], [1], [0, 0, 1, 1], [], []>} : vector<128x16xbf16>, vector<16x32xbf16>, vector<128x32xf32> -> vector<128x32xf32>
    %24 = arith.addf %21, %23 : vector<128x32xf32>
    %c0_9 = arith.constant 0 : index
    %c0_10 = arith.constant 0 : index
    %25 = vector.load %arg6[%c0_9, %c0_10] : memref<1x32xf32, #tpu.memory_space<vmem>>, vector<1x32xf32>
    %26 = vector.broadcast %19 : vector<128x1xf32> to vector<128x32xf32>
    %27 = vector.broadcast %25 : vector<1x32xf32> to vector<128x32xf32>
    %28 = arith.mulf %26, %27 : vector<128x32xf32>
    %29 = arith.addf %24, %28 : vector<128x32xf32>
    %c0_11 = arith.constant 0 : index
    %c0_12 = arith.constant 0 : index
    %30 = vector.load %arg7[%c0_11, %c0_12] : memref<1x32xf32, #tpu.memory_space<vmem>>, vector<1x32xf32>
    %31 = vector.broadcast %30 : vector<1x32xf32> to vector<128x32xf32>
    %32 = arith.addf %29, %31 : vector<128x32xf32>
    %cst_13 = arith.constant 0.000000e+00 : f32
    %33 = vector.broadcast %cst_13 : f32 to vector<128x32xf32>
    %34 = arith.maximumf %32, %33 : vector<128x32xf32>
    %35 = arith.truncf %34 : vector<128x32xf32> to vector<128x32xbf16>
    %c0_14 = arith.constant 0 : index
    %c0_15 = arith.constant 0 : index
    %36 = vector.load %arg8[%c0_14, %c0_15] : memref<32x32xbf16, #tpu.memory_space<vmem>>, vector<32x32xbf16>
    %cst_16 = arith.constant dense<0.000000e+00> : vector<128x32xf32>
    %37 = tpu.matmul %35, %36, %cst_16 {dimension_numbers = #tpu.dot_dimension_numbers<[1], [0], [0], [1], [0, 0, 1, 1], [], []>} : vector<128x32xbf16>, vector<32x32xbf16>, vector<128x32xf32> -> vector<128x32xf32>
    %c0_17 = arith.constant 0 : index
    %c0_18 = arith.constant 0 : index
    %38 = vector.load %arg9[%c0_17, %c0_18] : memref<1x32xf32, #tpu.memory_space<vmem>>, vector<1x32xf32>
    %39 = vector.broadcast %38 : vector<1x32xf32> to vector<128x32xf32>
    %40 = arith.addf %37, %39 : vector<128x32xf32>
    %cst_19 = arith.constant 0.000000e+00 : f32
    %41 = vector.broadcast %cst_19 : f32 to vector<128x32xf32>
    %42 = arith.maximumf %40, %41 : vector<128x32xf32>
    %43 = arith.truncf %42 : vector<128x32xf32> to vector<128x32xbf16>
    %c0_20 = arith.constant 0 : index
    %c0_21 = arith.constant 0 : index
    %44 = vector.load %arg10[%c0_20, %c0_21] : memref<32x32xbf16, #tpu.memory_space<vmem>>, vector<32x32xbf16>
    %cst_22 = arith.constant dense<0.000000e+00> : vector<128x32xf32>
    %45 = tpu.matmul %43, %44, %cst_22 {dimension_numbers = #tpu.dot_dimension_numbers<[1], [0], [0], [1], [0, 0, 1, 1], [], []>} : vector<128x32xbf16>, vector<32x32xbf16>, vector<128x32xf32> -> vector<128x32xf32>
    %c0_23 = arith.constant 0 : index
    %c0_24 = arith.constant 0 : index
    %46 = vector.load %arg11[%c0_23, %c0_24] : memref<1x32xf32, #tpu.memory_space<vmem>>, vector<1x32xf32>
    %47 = vector.broadcast %46 : vector<1x32xf32> to vector<128x32xf32>
    %48 = arith.addf %45, %47 : vector<128x32xf32>
    %cst_25 = arith.constant 0.000000e+00 : f32
    %49 = vector.broadcast %cst_25 : f32 to vector<128x32xf32>
    %50 = arith.maximumf %48, %49 : vector<128x32xf32>
    %c0_26 = arith.constant 0 : index
    %c0_27 = arith.constant 0 : index
    %51 = vector.load %arg12[%c0_26, %c0_27] : memref<1x32xf32, #tpu.memory_space<vmem>>, vector<1x32xf32>
    %52 = vector.broadcast %51 : vector<1x32xf32> to vector<128x32xf32>
    %53 = arith.mulf %50, %52 : vector<128x32xf32>
    %cst_28 = arith.constant dense<0.000000e+00> : vector<128xf32>
    %54 = vector.multi_reduction <add>, %53, %cst_28 [1] : vector<128x32xf32> to vector<128xf32>
    %55 = vector.shape_cast %54 : vector<128xf32> to vector<128x1xf32>
    %56 = vector.broadcast %55 : vector<128x1xf32> to vector<128x3xf32>
    %57 = arith.mulf %18, %56 : vector<128x3xf32>
    %cst_29 = arith.constant -1.000000e+02 : f32
    %cst_30 = arith.constant 1.000000e+02 : f32
    %58 = vector.broadcast %cst_29 : f32 to vector<128x3xf32>
    %59 = arith.maximumf %58, %57 : vector<128x3xf32>
    %60 = vector.broadcast %cst_30 : f32 to vector<128x3xf32>
    %61 = arith.minimumf %60, %59 : vector<128x3xf32>
    %62 = arith.truncf %42 : vector<128x32xf32> to vector<128x32xbf16>
    %c0_31 = arith.constant 0 : index
    %c0_32 = arith.constant 0 : index
    %63 = vector.load %arg23[%c0_31, %c0_32] : memref<128x35xbf16, #tpu.memory_space<vmem>>, vector<128x32xbf16>
    tpu.vector_store %arg23[%c0_31, %c0_32], %62 {strides = array<i32>} : memref<128x35xbf16, #tpu.memory_space<vmem>>, vector<128x32xbf16>,
    %64 = arith.truncf %61 : vector<128x3xf32> to vector<128x3xbf16>
    %c0_33 = arith.constant 0 : index
    %c32 = arith.constant 32 : index
    %65 = vector.load %arg23[%c0_33, %c32] : memref<128x35xbf16, #tpu.memory_space<vmem>>, vector<128x3xbf16>
    tpu.vector_store %arg23[%c0_33, %c32], %64 {strides = array<i32>} : memref<128x35xbf16, #tpu.memory_space<vmem>>, vector<128x3xbf16>,
    %c0_34 = arith.constant 0 : index
    %c0_35 = arith.constant 0 : index
    %66 = vector.load %arg1[%c0_34, %c0_35] : memref<1x128xi32, #tpu.memory_space<vmem>>, vector<1x128xi32>
    %67 = tpu.iota {dimensions = array<i32: 0>} : vector<16x128xi32>
    %68 = vector.broadcast %66 : vector<1x128xi32> to vector<16x128xi32>
    %69 = arith.cmpi eq, %67, %68 : vector<16x128xi32>
    %70 = arith.extui %69 : vector<16x128xi1> to vector<16x128xi32>
    %71 = arith.sitofp %70 : vector<16x128xi32> to vector<16x128xf32>
    %72 = arith.truncf %71 : vector<16x128xf32> to vector<16x128xbf16>
    %c0_36 = arith.constant 0 : index
    %c0_37 = arith.constant 0 : index
    %73 = vector.load %arg22[%c0_36, %c0_37] : memref<16x35xf32, #tpu.memory_space<vmem>>, vector<16x35xf32>
    %c0_38 = arith.constant 0 : index
    %c0_39 = arith.constant 0 : index
    %74 = vector.load %arg23[%c0_38, %c0_39] : memref<128x35xbf16, #tpu.memory_space<vmem>>, vector<128x35xbf16>
    %cst_40 = arith.constant dense<0.000000e+00> : vector<16x35xf32>
    %75 = tpu.matmul %72, %74, %cst_40 {dimension_numbers = #tpu.dot_dimension_numbers<[1], [0], [0], [1], [0, 0, 1, 1], [], []>} : vector<16x128xbf16>, vector<128x35xbf16>, vector<16x35xf32> -> vector<16x35xf32>
    %76 = arith.addf %73, %75 : vector<16x35xf32>
    %c0_41 = arith.constant 0 : index
    %c0_42 = arith.constant 0 : index
    %77 = vector.load %arg22[%c0_41, %c0_42] : memref<16x35xf32, #tpu.memory_space<vmem>>, vector<16x35xf32>
    tpu.vector_store %arg22[%c0_41, %c0_42], %76 {strides = array<i32>} : memref<16x35xf32, #tpu.memory_space<vmem>>, vector<16x35xf32>,
    %c0_i32_43 = arith.constant 0 : i32
    %78 = arith.cmpi eq, %arg0, %c0_i32_43 : i32
    %79 = arith.extui %78 : i1 to i32
    %c0_i32_44 = arith.constant 0 : i32
    %80 = arith.cmpi ne, %79, %c0_i32_44 : i32
    scf.if %80 {
      %c0_45 = arith.constant 0 : index
      %c0_46 = arith.constant 0 : index
      %81 = vector.load %arg22[%c0_45, %c0_46] : memref<16x35xf32, #tpu.memory_space<vmem>>, vector<16x35xf32>
      %82 = vector.extract_strided_slice %81 {offsets = [0, 0], sizes = [16, 32], strides = [1, 1]} : vector<16x35xf32> to vector<16x32xf32>
      %83 = vector.extract_strided_slice %81 {offsets = [0, 32], sizes = [16, 3], strides = [1, 1]} : vector<16x35xf32> to vector<16x3xf32>
      %c0_47 = arith.constant 0 : index
      %c0_48 = arith.constant 0 : index
      %84 = vector.load %arg13[%c0_47, %c0_48] : memref<16x1xf32, #tpu.memory_space<vmem>>, vector<16x1xf32>
      %85 = vector.broadcast %84 : vector<16x1xf32> to vector<16x3xf32>
      %86 = arith.mulf %83, %85 : vector<16x3xf32>
      %c0_49 = arith.constant 0 : index
      %c0_50 = arith.constant 0 : index
      %87 = vector.load %arg21[%c0_49, %c0_50] : memref<16x3xf32, #tpu.memory_space<vmem>>, vector<16x3xf32>
      tpu.vector_store %arg21[%c0_49, %c0_50], %86 {strides = array<i32>} : memref<16x3xf32, #tpu.memory_space<vmem>>, vector<16x3xf32>,
      %c0_51 = arith.constant 0 : index
      %c0_52 = arith.constant 0 : index
      %88 = vector.load %arg14[%c0_51, %c0_52] : memref<16x32xf32, #tpu.memory_space<vmem>>, vector<16x32xf32>
      %89 = arith.truncf %88 : vector<16x32xf32> to vector<16x32xbf16>
      %c0_53 = arith.constant 0 : index
      %c0_54 = arith.constant 0 : index
      %90 = vector.load %arg15[%c0_53, %c0_54] : memref<32x32xbf16, #tpu.memory_space<vmem>>, vector<32x32xbf16>
      %cst_55 = arith.constant dense<0.000000e+00> : vector<16x32xf32>
      %91 = tpu.matmul %89, %90, %cst_55 {dimension_numbers = #tpu.dot_dimension_numbers<[1], [0], [0], [1], [0, 0, 1, 1], [], []>} : vector<16x32xbf16>, vector<32x32xbf16>, vector<16x32xf32> -> vector<16x32xf32>
      %92 = arith.truncf %82 : vector<16x32xf32> to vector<16x32xbf16>
      %c0_56 = arith.constant 0 : index
      %c0_57 = arith.constant 0 : index
      %93 = vector.load %arg16[%c0_56, %c0_57] : memref<32x32xbf16, #tpu.memory_space<vmem>>, vector<32x32xbf16>
      %cst_58 = arith.constant dense<0.000000e+00> : vector<16x32xf32>
      %94 = tpu.matmul %92, %93, %cst_58 {dimension_numbers = #tpu.dot_dimension_numbers<[1], [0], [0], [1], [0, 0, 1, 1], [], []>} : vector<16x32xbf16>, vector<32x32xbf16>, vector<16x32xf32> -> vector<16x32xf32>
      %95 = arith.addf %91, %94 : vector<16x32xf32>
      %c0_59 = arith.constant 0 : index
      %c0_60 = arith.constant 0 : index
      %96 = vector.load %arg17[%c0_59, %c0_60] : memref<1x32xf32, #tpu.memory_space<vmem>>, vector<1x32xf32>
      %97 = vector.broadcast %96 : vector<1x32xf32> to vector<16x32xf32>
      %98 = arith.addf %95, %97 : vector<16x32xf32>
      %cst_61 = arith.constant 0.000000e+00 : f32
      %99 = vector.broadcast %cst_61 : f32 to vector<16x32xf32>
      %100 = arith.maximumf %98, %99 : vector<16x32xf32>
      %101 = arith.truncf %100 : vector<16x32xf32> to vector<16x32xbf16>
      %c0_62 = arith.constant 0 : index
      %c0_63 = arith.constant 0 : index
      %102 = vector.load %arg18[%c0_62, %c0_63] : memref<32x32xbf16, #tpu.memory_space<vmem>>, vector<32x32xbf16>
      %cst_64 = arith.constant dense<0.000000e+00> : vector<16x32xf32>
      %103 = tpu.matmul %101, %102, %cst_64 {dimension_numbers = #tpu.dot_dimension_numbers<[1], [0], [0], [1], [0, 0, 1, 1], [], []>} : vector<16x32xbf16>, vector<32x32xbf16>, vector<16x32xf32> -> vector<16x32xf32>
      %104 = arith.addf %88, %103 : vector<16x32xf32>
      %c0_65 = arith.constant 0 : index
      %c0_66 = arith.constant 0 : index
      %105 = vector.load %arg19[%c0_65, %c0_66] : memref<1x32xf32, #tpu.memory_space<vmem>>, vector<1x32xf32>
      %106 = vector.broadcast %105 : vector<1x32xf32> to vector<16x32xf32>
      %107 = arith.addf %104, %106 : vector<16x32xf32>
      %c0_67 = arith.constant 0 : index
      %c0_68 = arith.constant 0 : index
      %108 = vector.load %arg20[%c0_67, %c0_68] : memref<16x32xf32, #tpu.memory_space<vmem>>, vector<16x32xf32>
      tpu.vector_store %arg20[%c0_67, %c0_68], %107 {strides = array<i32>} : memref<16x32xf32, #tpu.memory_space<vmem>>, vector<16x32xf32>,
    } else {
    }
    return
  }
  func.func @transform_0(%arg0: i32) -> (i32, i32) {
    %c0_i32 = arith.constant 0 : i32
    %c0_i32_0 = arith.constant 0 : i32
    return %c0_i32, %arg0 : i32, i32
  }
  func.func @transform_1(%arg0: i32) -> (i32, i32) {
    %c0_i32 = arith.constant 0 : i32
    %c0_i32_0 = arith.constant 0 : i32
    return %arg0, %c0_i32 : i32, i32
  }
  func.func @transform_2(%arg0: i32) -> (i32, i32) {
    %c0_i32 = arith.constant 0 : i32
    %c0_i32_0 = arith.constant 0 : i32
    return %arg0, %c0_i32 : i32, i32
  }
  func.func @transform_3(%arg0: i32) -> (i32, i32) {
    %c0_i32 = arith.constant 0 : i32
    %c0_i32_0 = arith.constant 0 : i32
    %c0_i32_1 = arith.constant 0 : i32
    return %c0_i32, %c0_i32_0 : i32, i32
  }
  func.func @transform_4(%arg0: i32) -> (i32, i32) {
    %c0_i32 = arith.constant 0 : i32
    %c0_i32_0 = arith.constant 0 : i32
    %c0_i32_1 = arith.constant 0 : i32
    return %c0_i32, %c0_i32_0 : i32, i32
  }
  func.func @transform_5(%arg0: i32) -> (i32, i32) {
    %c0_i32 = arith.constant 0 : i32
    %c0_i32_0 = arith.constant 0 : i32
    %c0_i32_1 = arith.constant 0 : i32
    return %c0_i32, %c0_i32_0 : i32, i32
  }
  func.func @transform_6(%arg0: i32) -> (i32, i32) {
    %c0_i32 = arith.constant 0 : i32
    %c0_i32_0 = arith.constant 0 : i32
    %c0_i32_1 = arith.constant 0 : i32
    return %c0_i32, %c0_i32_0 : i32, i32
  }
  func.func @transform_7(%arg0: i32) -> (i32, i32) {
    %c0_i32 = arith.constant 0 : i32
    %c0_i32_0 = arith.constant 0 : i32
    %c0_i32_1 = arith.constant 0 : i32
    return %c0_i32, %c0_i32_0 : i32, i32
  }
  func.func @transform_8(%arg0: i32) -> (i32, i32) {
    %c0_i32 = arith.constant 0 : i32
    %c0_i32_0 = arith.constant 0 : i32
    %c0_i32_1 = arith.constant 0 : i32
    return %c0_i32, %c0_i32_0 : i32, i32
  }
  func.func @transform_9(%arg0: i32) -> (i32, i32) {
    %c0_i32 = arith.constant 0 : i32
    %c0_i32_0 = arith.constant 0 : i32
    %c0_i32_1 = arith.constant 0 : i32
    return %c0_i32, %c0_i32_0 : i32, i32
  }
  func.func @transform_10(%arg0: i32) -> (i32, i32) {
    %c0_i32 = arith.constant 0 : i32
    %c0_i32_0 = arith.constant 0 : i32
    %c0_i32_1 = arith.constant 0 : i32
    return %c0_i32, %c0_i32_0 : i32, i32
  }
  func.func @transform_11(%arg0: i32) -> (i32, i32) {
    %c0_i32 = arith.constant 0 : i32
    %c0_i32_0 = arith.constant 0 : i32
    %c0_i32_1 = arith.constant 0 : i32
    return %c0_i32, %c0_i32_0 : i32, i32
  }
  func.func @transform_12(%arg0: i32) -> (i32, i32) {
    %c0_i32 = arith.constant 0 : i32
    %c0_i32_0 = arith.constant 0 : i32
    %c0_i32_1 = arith.constant 0 : i32
    return %c0_i32, %c0_i32_0 : i32, i32
  }
  func.func @transform_13(%arg0: i32) -> (i32, i32) {
    %c0_i32 = arith.constant 0 : i32
    %c0_i32_0 = arith.constant 0 : i32
    %c0_i32_1 = arith.constant 0 : i32
    return %c0_i32, %c0_i32_0 : i32, i32
  }
  func.func @transform_14(%arg0: i32) -> (i32, i32) {
    %c0_i32 = arith.constant 0 : i32
    %c0_i32_0 = arith.constant 0 : i32
    %c0_i32_1 = arith.constant 0 : i32
    return %c0_i32, %c0_i32_0 : i32, i32
  }
  func.func @transform_15(%arg0: i32) -> (i32, i32) {
    %c0_i32 = arith.constant 0 : i32
    %c0_i32_0 = arith.constant 0 : i32
    %c0_i32_1 = arith.constant 0 : i32
    return %c0_i32, %c0_i32_0 : i32, i32
  }
  func.func @transform_16(%arg0: i32) -> (i32, i32) {
    %c0_i32 = arith.constant 0 : i32
    %c0_i32_0 = arith.constant 0 : i32
    %c0_i32_1 = arith.constant 0 : i32
    return %c0_i32, %c0_i32_0 : i32, i32
  }
  func.func @transform_17(%arg0: i32) -> (i32, i32) {
    %c0_i32 = arith.constant 0 : i32
    %c0_i32_0 = arith.constant 0 : i32
    %c0_i32_1 = arith.constant 0 : i32
    return %c0_i32, %c0_i32_0 : i32, i32
  }
  func.func @transform_18(%arg0: i32) -> (i32, i32) {
    %c0_i32 = arith.constant 0 : i32
    %c0_i32_0 = arith.constant 0 : i32
    %c0_i32_1 = arith.constant 0 : i32
    return %c0_i32, %c0_i32_0 : i32, i32
  }
  func.func @transform_19(%arg0: i32) -> (i32, i32) {
    %c0_i32 = arith.constant 0 : i32
    %c0_i32_0 = arith.constant 0 : i32
    %c0_i32_1 = arith.constant 0 : i32
    return %c0_i32, %c0_i32_0 : i32, i32
  }
  func.func @transform_20(%arg0: i32) -> (i32, i32) {
    %c0_i32 = arith.constant 0 : i32
    %c0_i32_0 = arith.constant 0 : i32
    %c0_i32_1 = arith.constant 0 : i32
    return %c0_i32, %c0_i32_0 : i32, i32
  }
}

</mosaic_0001>

<llo_original>
// kernel: tpu_custom_call.1
$region0: #{tpu_custom_call.1}
  #allocation0 [shape = 'u32[]', space=smem, size = 0x4, offset = 0x4, fixed_abs, tag = 'smem constant byte address 0x4 - core index']
  #allocation1 [shape = 'u32[144,128]{1,0:T(1,128)}', space=vmem, size = 0x12000, scoped, tag = 'internal scratch']
  #allocation2 [shape = 'f32[16,35]{1,0:T(8,128)}', space=vmem, size = 0x2000, scoped, tag = 'scratch operand']
  #allocation3 [shape = 'bf16[128,35]{1,0:T(16,128)(2,1)}', space=vmem, size = 0x8000, scoped, tag = 'scratch operand']
  %s0 = inlined_call_operand.vmem [shape: s32[1,128], index: 0, kind: input, shape index: {}]
  %s1 = inlined_call_operand.vmem [shape: s32[128,2], index: 1, kind: input, shape index: {}]
  %s2 = inlined_call_operand.vmem [shape: f32[128,4], index: 2, kind: input, shape index: {}]
  %s3 = inlined_call_operand.vmem [shape: bf16[16,32], index: 3, kind: input, shape index: {}]
  %s4 = inlined_call_operand.vmem [shape: bf16[16,32], index: 4, kind: input, shape index: {}]
  %s5 = inlined_call_operand.vmem [shape: f32[1,32], index: 5, kind: input, shape index: {}]
  %s6 = inlined_call_operand.vmem [shape: f32[1,32], index: 6, kind: input, shape index: {}]
  %s7 = inlined_call_operand.vmem [shape: bf16[32,32], index: 7, kind: input, shape index: {}]
  %s8 = inlined_call_operand.vmem [shape: f32[1,32], index: 8, kind: input, shape index: {}]
  %s9 = inlined_call_operand.vmem [shape: bf16[32,32], index: 9, kind: input, shape index: {}]
  %s10 = inlined_call_operand.vmem [shape: f32[1,32], index: 10, kind: input, shape index: {}]
  %s11 = inlined_call_operand.vmem [shape: f32[1,32], index: 11, kind: input, shape index: {}]
  %s12 = inlined_call_operand.vmem [shape: f32[16,1], index: 12, kind: input, shape index: {}]
  %s13 = inlined_call_operand.vmem [shape: f32[16,32], index: 13, kind: input, shape index: {}]
  %s14 = inlined_call_operand.vmem [shape: bf16[32,32], index: 14, kind: input, shape index: {}]
  %s15 = inlined_call_operand.vmem [shape: bf16[32,32], index: 15, kind: input, shape index: {}]
  %s16 = inlined_call_operand.vmem [shape: f32[1,32], index: 16, kind: input, shape index: {}]
  %s17 = inlined_call_operand.vmem [shape: bf16[32,32], index: 17, kind: input, shape index: {}]
  %s18 = inlined_call_operand.vmem [shape: f32[1,32], index: 18, kind: input, shape index: {}]
  %s19 = inlined_call_operand.hbm [shape: f32[16,32], index: 19, kind: output, shape index: {0}]
  %s20 = inlined_call_operand.vmem [shape: f32[16,3], index: 20, kind: output, shape index: {1}]
  %21 = xla_tuple %s19, %s20
  %s22 = sld [smem:[#allocation0]]
  $region102: #{tpu_custom_call.1} parent=0
    _
  %s24 = ssub.s32 1, %s22
  %s25 = scalar_select 0, %s24, %s22
  $region1: #{tpu_custom_call.1} parent=0
    #allocation4 [shape = 'u8[8192]{0}', space=vmem, size = 0x2000, scoped, tag = 'output window, operand 0, single buffered']
    #allocation5 [shape = 's32[1]{0}', space=sflag, size = 0x4, scoped, tag = 'scoped memory for tpu_custom_call.1']
    %26 = vsyncpa [#allocation5], 0
    // Predicated region
    $region2: #{tpu_custom_call.1} parent=1 // pred_check
      _
    $region3: #{tpu_custom_call.1} parent=1 // pred_check_branch
      %28 = sbr.rel (0) target = $region5
    $region4: #{tpu_custom_call.1} parent=1 // pred_region
      _
    $region5: #{tpu_custom_call.1} parent=1 // pred_fallthru
      _
    // Predicated region
    $region6: #{tpu_custom_call.1} parent=1 // pred_check
      _
    $region7: #{tpu_custom_call.1} parent=1 // pred_check_branch
      %30 = sbr.rel (0) target = $region9
    $region8: #{tpu_custom_call.1} parent=1 // pred_region
      _
    $region9: #{tpu_custom_call.1} parent=1 // pred_fallthru
      _
    // Predicated region
    $region10: #{tpu_custom_call.1} parent=1 // pred_check
      _
    $region11: #{tpu_custom_call.1} parent=1 // pred_check_branch
      %32 = sbr.rel (0) target = $region13
    $region12: #{tpu_custom_call.1} parent=1 // pred_region
      _
    $region13: #{tpu_custom_call.1} parent=1 // pred_fallthru
      _
    // Predicated region
    $region14: #{tpu_custom_call.1} parent=1 // pred_check
      _
    $region15: #{tpu_custom_call.1} parent=1 // pred_check_branch
      %34 = sbr.rel (0) target = $region17
    $region16: #{tpu_custom_call.1} parent=1 // pred_region
      _
    $region17: #{tpu_custom_call.1} parent=1 // pred_fallthru
      _
    // Predicated region
    $region18: #{tpu_custom_call.1} parent=1 // pred_check
      _
    $region19: #{tpu_custom_call.1} parent=1 // pred_check_branch
      %36 = sbr.rel (0) target = $region21
    $region20: #{tpu_custom_call.1} parent=1 // pred_region
      _
    $region21: #{tpu_custom_call.1} parent=1 // pred_fallthru
      _
    // Predicated region
    $region22: #{tpu_custom_call.1} parent=1 // pred_check
      _
    $region23: #{tpu_custom_call.1} parent=1 // pred_check_branch
      %38 = sbr.rel (0) target = $region25
    $region24: #{tpu_custom_call.1} parent=1 // pred_region
      _
    $region25: #{tpu_custom_call.1} parent=1 // pred_fallthru
      _
    // Predicated region
    $region26: #{tpu_custom_call.1} parent=1 // pred_check
      _
    $region27: #{tpu_custom_call.1} parent=1 // pred_check_branch
      %40 = sbr.rel (0) target = $region29
    $region28: #{tpu_custom_call.1} parent=1 // pred_region
      _
    $region29: #{tpu_custom_call.1} parent=1 // pred_fallthru
      _
    // Predicated region
    $region30: #{tpu_custom_call.1} parent=1 // pred_check
      _
    $region31: #{tpu_custom_call.1} parent=1 // pred_check_branch
      %42 = sbr.rel (0) target = $region33
    $region32: #{tpu_custom_call.1} parent=1 // pred_region
      _
    $region33: #{tpu_custom_call.1} parent=1 // pred_fallthru
      _
    // Predicated region
    $region34: #{tpu_custom_call.1} parent=1 // pred_check
      _
    $region35: #{tpu_custom_call.1} parent=1 // pred_check_branch
      %44 = sbr.rel (0) target = $region37
    $region36: #{tpu_custom_call.1} parent=1 // pred_region
      _
    $region37: #{tpu_custom_call.1} parent=1 // pred_fallthru
      _
    // Predicated region
    $region38: #{tpu_custom_call.1} parent=1 // pred_check
      _
    $region39: #{tpu_custom_call.1} parent=1 // pred_check_branch
      %46 = sbr.rel (0) target = $region41
    $region40: #{tpu_custom_call.1} parent=1 // pred_region
      _
    $region41: #{tpu_custom_call.1} parent=1 // pred_fallthru
      _
    // Predicated region
    $region42: #{tpu_custom_call.1} parent=1 // pred_check
      _
    $region43: #{tpu_custom_call.1} parent=1 // pred_check_branch
      %48 = sbr.rel (0) target = $region45
    $region44: #{tpu_custom_call.1} parent=1 // pred_region
      _
    $region45: #{tpu_custom_call.1} parent=1 // pred_fallthru
      _
    // Predicated region
    $region46: #{tpu_custom_call.1} parent=1 // pred_check
      _
    $region47: #{tpu_custom_call.1} parent=1 // pred_check_branch
      %50 = sbr.rel (0) target = $region49
    $region48: #{tpu_custom_call.1} parent=1 // pred_region
      _
    $region49: #{tpu_custom_call.1} parent=1 // pred_fallthru
      _
    // Predicated region
    $region50: #{tpu_custom_call.1} parent=1 // pred_check
      _
    $region51: #{tpu_custom_call.1} parent=1 // pred_check_branch
      %52 = sbr.rel (0) target = $region53
    $region52: #{tpu_custom_call.1} parent=1 // pred_region
      _
    $region53: #{tpu_custom_call.1} parent=1 // pred_fallthru
      _
    // Predicated region
    $region54: #{tpu_custom_call.1} parent=1 // pred_check
      _
    $region55: #{tpu_custom_call.1} parent=1 // pred_check_branch
      %54 = sbr.rel (0) target = $region57
    $region56: #{tpu_custom_call.1} parent=1 // pred_region
      _
    $region57: #{tpu_custom_call.1} parent=1 // pred_fallthru
      _
    // Predicated region
    $region58: #{tpu_custom_call.1} parent=1 // pred_check
      _
    $region59: #{tpu_custom_call.1} parent=1 // pred_check_branch
      %56 = sbr.rel (0) target = $region61
    $region60: #{tpu_custom_call.1} parent=1 // pred_region
      _
    $region61: #{tpu_custom_call.1} parent=1 // pred_fallthru
      _
    // Predicated region
    $region62: #{tpu_custom_call.1} parent=1 // pred_check
      _
    $region63: #{tpu_custom_call.1} parent=1 // pred_check_branch
      %58 = sbr.rel (0) target = $region65
    $region64: #{tpu_custom_call.1} parent=1 // pred_region
      _
    $region65: #{tpu_custom_call.1} parent=1 // pred_fallthru
      _
    // Predicated region
    $region66: #{tpu_custom_call.1} parent=1 // pred_check
      _
    $region67: #{tpu_custom_call.1} parent=1 // pred_check_branch
      %60 = sbr.rel (0) target = $region69
    $region68: #{tpu_custom_call.1} parent=1 // pred_region
      _
    $region69: #{tpu_custom_call.1} parent=1 // pred_fallthru
      _
    // Predicated region
    $region70: #{tpu_custom_call.1} parent=1 // pred_check
      _
    $region71: #{tpu_custom_call.1} parent=1 // pred_check_branch
      %62 = sbr.rel (0) target = $region73
    $region72: #{tpu_custom_call.1} parent=1 // pred_region
      _
    $region73: #{tpu_custom_call.1} parent=1 // pred_fallthru
      _
    // Predicated region
    $region74: #{tpu_custom_call.1} parent=1 // pred_check
      _
    $region75: #{tpu_custom_call.1} parent=1 // pred_check_branch
      %64 = sbr.rel (0) target = $region77
    $region76: #{tpu_custom_call.1} parent=1 // pred_region
      _
    $region77: #{tpu_custom_call.1} parent=1 // pred_fallthru
      _
    %p66 = scmp.eq.s32.totalorder 0, 0
    // Predicated region
    $region78: #{tpu_custom_call.1} parent=1 // pred_check
      %p67 = pneg %p66
    $region79: #{tpu_custom_call.1} parent=1 // pred_check_branch
      %69 = sbr.rel (%p67) target = $region81
    $region80: #{tpu_custom_call.1} parent=1 // pred_region
      %vm70 = vcmask 285696
      %71 = vst.msk [vmem:[#allocation2] sm:$0xff] %vm70, 0.0
      %72 = vst.msk [vmem:[#allocation2 + $0x8] sm:$0xff] %vm70, 0.0
    $region81: #{tpu_custom_call.1} parent=1 // pred_fallthru
      _
    %v73 = vld [vmem:[%s1] sm:$0xff]
    %v74 = vld [vmem:[%s1 + $0x8] sm:$0xff]
    %v75 = vld [vmem:[%s1 + $0x10] sm:$0xff]
    %v76 = vld [vmem:[%s1 + $0x18] sm:$0xff]
    %v77 = vld [vmem:[%s1 + $0x20] sm:$0xff]
    %v78 = vld [vmem:[%s1 + $0x28] sm:$0xff]
    %v79 = vld [vmem:[%s1 + $0x30] sm:$0xff]
    %v80 = vld [vmem:[%s1 + $0x38] sm:$0xff]
    %v81 = vld [vmem:[%s1 + $0x40] sm:$0xff]
    %v82 = vld [vmem:[%s1 + $0x48] sm:$0xff]
    %v83 = vld [vmem:[%s1 + $0x50] sm:$0xff]
    %v84 = vld [vmem:[%s1 + $0x58] sm:$0xff]
    %v85 = vld [vmem:[%s1 + $0x60] sm:$0xff]
    %v86 = vld [vmem:[%s1 + $0x68] sm:$0xff]
    %v87 = vld [vmem:[%s1 + $0x70] sm:$0xff]
    %v88 = vld [vmem:[%s1 + $0x78] sm:$0xff]
    %v89 = vlaneseq
    %v90 = vand.u32 %v89, 127
    %91 = vset.pattern.permute.xlu0 0
    %92 = vperm.xlu0 %91, %v73
    %v93 = vpop.permute.xlu0 %92
    %94 = vset.pattern.permute.xlu0 0
    %95 = vperm.xlu0 %94, %v74
    %v96 = vpop.permute.xlu0 %95
    %97 = vset.pattern.permute.xlu0 0
    %98 = vperm.xlu0 %97, %v75
    %v99 = vpop.permute.xlu0 %98
    %100 = vset.pattern.permute.xlu0 0
    %101 = vperm.xlu0 %100, %v76
    %v102 = vpop.permute.xlu0 %101
    %103 = vset.pattern.permute.xlu0 0
    %104 = vperm.xlu0 %103, %v77
    %v105 = vpop.permute.xlu0 %104
    %106 = vset.pattern.permute.xlu0 0
    %107 = vperm.xlu0 %106, %v78
    %v108 = vpop.permute.xlu0 %107
    %109 = vset.pattern.permute.xlu0 0
    %110 = vperm.xlu0 %109, %v79
    %v111 = vpop.permute.xlu0 %110
    %112 = vset.pattern.permute.xlu0 0
    %113 = vperm.xlu0 %112, %v80
    %v114 = vpop.permute.xlu0 %113
    %115 = vset.pattern.permute.xlu0 0
    %116 = vperm.xlu0 %115, %v81
    %v117 = vpop.permute.xlu0 %116
    %118 = vset.pattern.permute.xlu0 0
    %119 = vperm.xlu0 %118, %v82
    %v120 = vpop.permute.xlu0 %119
    %121 = vset.pattern.permute.xlu0 0
    %122 = vperm.xlu0 %121, %v83
    %v123 = vpop.permute.xlu0 %122
    %124 = vset.pattern.permute.xlu0 0
    %125 = vperm.xlu0 %124, %v84
    %v126 = vpop.permute.xlu0 %125
    %127 = vset.pattern.permute.xlu0 0
    %128 = vperm.xlu0 %127, %v85
    %v129 = vpop.permute.xlu0 %128
    %130 = vset.pattern.permute.xlu0 0
    %131 = vperm.xlu0 %130, %v86
    %v132 = vpop.permute.xlu0 %131
    %133 = vset.pattern.permute.xlu0 0
    %134 = vperm.xlu0 %133, %v87
    %v135 = vpop.permute.xlu0 %134
    %136 = vset.pattern.permute.xlu0 0
    %137 = vperm.xlu0 %136, %v88
    %v138 = vpop.permute.xlu0 %137
    %vm139 = vcmp.eq.s32.totalorder %v90, %v93
    %vm140 = vcmp.eq.s32.totalorder %v90, %v96
    %vm141 = vcmp.eq.s32.totalorder %v90, %v99
    %vm142 = vcmp.eq.s32.totalorder %v90, %v102
    %vm143 = vcmp.eq.s32.totalorder %v90, %v105
    %vm144 = vcmp.eq.s32.totalorder %v90, %v108
    %vm145 = vcmp.eq.s32.totalorder %v90, %v111
    %vm146 = vcmp.eq.s32.totalorder %v90, %v114
    %vm147 = vcmp.eq.s32.totalorder %v90, %v117
    %vm148 = vcmp.eq.s32.totalorder %v90, %v120
    %vm149 = vcmp.eq.s32.totalorder %v90, %v123
    %vm150 = vcmp.eq.s32.totalorder %v90, %v126
    %vm151 = vcmp.eq.s32.totalorder %v90, %v129
    %vm152 = vcmp.eq.s32.totalorder %v90, %v132
    %vm153 = vcmp.eq.s32.totalorder %v90, %v135
    %vm154 = vcmp.eq.s32.totalorder %v90, %v138
    %v155 = vsel %vm139, 1, 0
    %v156 = vsel %vm140, 1, 0
    %v157 = vsel %vm141, 1, 0
    %v158 = vsel %vm142, 1, 0
    %v159 = vsel %vm143, 1, 0
    %v160 = vsel %vm144, 1, 0
    %v161 = vsel %vm145, 1, 0
    %v162 = vsel %vm146, 1, 0
    %v163 = vsel %vm147, 1, 0
    %v164 = vsel %vm148, 1, 0
    %v165 = vsel %vm149, 1, 0
    %v166 = vsel %vm150, 1, 0
    %v167 = vsel %vm151, 1, 0
    %v168 = vsel %vm152, 1, 0
    %v169 = vsel %vm153, 1, 0
    %v170 = vsel %vm154, 1, 0
    %v171 = vcvt.s32.f32 %v155
    %v172 = vcvt.s32.f32 %v156
    %v173 = vcvt.s32.f32 %v157
    %v174 = vcvt.s32.f32 %v158
    %v175 = vcvt.s32.f32 %v159
    %v176 = vcvt.s32.f32 %v160
    %v177 = vcvt.s32.f32 %v161
    %v178 = vcvt.s32.f32 %v162
    %v179 = vcvt.s32.f32 %v163
    %v180 = vcvt.s32.f32 %v164
    %v181 = vcvt.s32.f32 %v165
    %v182 = vcvt.s32.f32 %v166
    %v183 = vcvt.s32.f32 %v167
    %v184 = vcvt.s32.f32 %v168
    %v185 = vcvt.s32.f32 %v169
    %v186 = vcvt.s32.f32 %v170
    %v187 = vpack.c.bf16 %v172, %v171
    %v188 = vpack.c.bf16 %v174, %v173
    %v189 = vpack.c.bf16 %v176, %v175
    %v190 = vpack.c.bf16 %v178, %v177
    %v191 = vpack.c.bf16 %v180, %v179
    %v192 = vpack.c.bf16 %v182, %v181
    %v193 = vpack.c.bf16 %v184, %v183
    %v194 = vpack.c.bf16 %v186, %v185
    %195 = vset.pattern.permute.xlu0 1
    %196 = vperm.xlu0 %195, %v73
    %v197 = vpop.permute.xlu0 %196
    %198 = vset.pattern.permute.xlu0 1
    %199 = vperm.xlu0 %198, %v74
    %v200 = vpop.permute.xlu0 %199
    %201 = vset.pattern.permute.xlu0 1
    %202 = vperm.xlu0 %201, %v75
    %v203 = vpop.permute.xlu0 %202
    %204 = vset.pattern.permute.xlu0 1
    %205 = vperm.xlu0 %204, %v76
    %v206 = vpop.permute.xlu0 %205
    %207 = vset.pattern.permute.xlu0 1
    %208 = vperm.xlu0 %207, %v77
    %v209 = vpop.permute.xlu0 %208
    %210 = vset.pattern.permute.xlu0 1
    %211 = vperm.xlu0 %210, %v78
    %v212 = vpop.permute.xlu0 %211
    %213 = vset.pattern.permute.xlu0 1
    %214 = vperm.xlu0 %213, %v79
    %v215 = vpop.permute.xlu0 %214
    %216 = vset.pattern.permute.xlu0 1
    %217 = vperm.xlu0 %216, %v80
    %v218 = vpop.permute.xlu0 %217
    %219 = vset.pattern.permute.xlu0 1
    %220 = vperm.xlu0 %219, %v81
    %v221 = vpop.permute.xlu0 %220
    %222 = vset.pattern.permute.xlu0 1
    %223 = vperm.xlu0 %222, %v82
    %v224 = vpop.permute.xlu0 %223
    %225 = vset.pattern.permute.xlu0 1
    %226 = vperm.xlu0 %225, %v83
    %v227 = vpop.permute.xlu0 %226
    %228 = vset.pattern.permute.xlu0 1
    %229 = vperm.xlu0 %228, %v84
    %v230 = vpop.permute.xlu0 %229
    %231 = vset.pattern.permute.xlu0 1
    %232 = vperm.xlu0 %231, %v85
    %v233 = vpop.permute.xlu0 %232
    %234 = vset.pattern.permute.xlu0 1
    %235 = vperm.xlu0 %234, %v86
    %v236 = vpop.permute.xlu0 %235
    %237 = vset.pattern.permute.xlu0 1
    %238 = vperm.xlu0 %237, %v87
    %v239 = vpop.permute.xlu0 %238
    %240 = vset.pattern.permute.xlu0 1
    %241 = vperm.xlu0 %240, %v88
    %v242 = vpop.permute.xlu0 %241
    %vm243 = vcmp.eq.s32.totalorder %v90, %v197
    %vm244 = vcmp.eq.s32.totalorder %v90, %v200
    %vm245 = vcmp.eq.s32.totalorder %v90, %v203
    %vm246 = vcmp.eq.s32.totalorder %v90, %v206
    %vm247 = vcmp.eq.s32.totalorder %v90, %v209
    %vm248 = vcmp.eq.s32.totalorder %v90, %v212
    %vm249 = vcmp.eq.s32.totalorder %v90, %v215
    %vm250 = vcmp.eq.s32.totalorder %v90, %v218
    %vm251 = vcmp.eq.s32.totalorder %v90, %v221
    %vm252 = vcmp.eq.s32.totalorder %v90, %v224
    %vm253 = vcmp.eq.s32.totalorder %v90, %v227
    %vm254 = vcmp.eq.s32.totalorder %v90, %v230
    %vm255 = vcmp.eq.s32.totalorder %v90, %v233
    %vm256 = vcmp.eq.s32.totalorder %v90, %v236
    %vm257 = vcmp.eq.s32.totalorder %v90, %v239
    %vm258 = vcmp.eq.s32.totalorder %v90, %v242
    %v259 = vsel %vm243, 1, 0
    %v260 = vsel %vm244, 1, 0
    %v261 = vsel %vm245, 1, 0
    %v262 = vsel %vm246, 1, 0
    %v263 = vsel %vm247, 1, 0
    %v264 = vsel %vm248, 1, 0
    %v265 = vsel %vm249, 1, 0
    %v266 = vsel %vm250, 1, 0
    %v267 = vsel %vm251, 1, 0
    %v268 = vsel %vm252, 1, 0
    %v269 = vsel %vm253, 1, 0
    %v270 = vsel %vm254, 1, 0
    %v271 = vsel %vm255, 1, 0
    %v272 = vsel %vm256, 1, 0
    %v273 = vsel %vm257, 1, 0
    %v274 = vsel %vm258, 1, 0
    %v275 = vcvt.s32.f32 %v259
    %v276 = vcvt.s32.f32 %v260
    %v277 = vcvt.s32.f32 %v261
    %v278 = vcvt.s32.f32 %v262
    %v279 = vcvt.s32.f32 %v263
    %v280 = vcvt.s32.f32 %v264
    %v281 = vcvt.s32.f32 %v265
    %v282 = vcvt.s32.f32 %v266
    %v283 = vcvt.s32.f32 %v267
    %v284 = vcvt.s32.f32 %v268
    %v285 = vcvt.s32.f32 %v269
    %v286 = vcvt.s32.f32 %v270
    %v287 = vcvt.s32.f32 %v271
    %v288 = vcvt.s32.f32 %v272
    %v289 = vcvt.s32.f32 %v273
    %v290 = vcvt.s32.f32 %v274
    %v291 = vpack.c.bf16 %v276, %v275
    %v292 = vpack.c.bf16 %v278, %v277
    %v293 = vpack.c.bf16 %v280, %v279
    %v294 = vpack.c.bf16 %v282, %v281
    %v295 = vpack.c.bf16 %v284, %v283
    %v296 = vpack.c.bf16 %v286, %v285
    %v297 = vpack.c.bf16 %v288, %v287
    %v298 = vpack.c.bf16 %v290, %v289
    %v299 = vld [vmem:[%s2] sm:$0xff]
    %v300 = vld [vmem:[%s2 + $0x8] sm:$0xff]
    %v301 = vld [vmem:[%s2 + $0x10] sm:$0xff]
    %v302 = vld [vmem:[%s2 + $0x18] sm:$0xff]
    %v303 = vld [vmem:[%s2 + $0x20] sm:$0xff]
    %v304 = vld [vmem:[%s2 + $0x28] sm:$0xff]
    %v305 = vld [vmem:[%s2 + $0x30] sm:$0xff]
    %v306 = vld [vmem:[%s2 + $0x38] sm:$0xff]
    %v307 = vld [vmem:[%s2 + $0x40] sm:$0xff]
    %v308 = vld [vmem:[%s2 + $0x48] sm:$0xff]
    %v309 = vld [vmem:[%s2 + $0x50] sm:$0xff]
    %v310 = vld [vmem:[%s2 + $0x58] sm:$0xff]
    %v311 = vld [vmem:[%s2 + $0x60] sm:$0xff]
    %v312 = vld [vmem:[%s2 + $0x68] sm:$0xff]
    %v313 = vld [vmem:[%s2 + $0x70] sm:$0xff]
    %v314 = vld [vmem:[%s2 + $0x78] sm:$0xff]
    %v315 = vld [vmem:[%s3] sm:$0xf]
    %v316 = vld [vmem:[%s3 + $0x4] sm:$0xf]
    %v317 = vld [vmem:[%s4] sm:$0xf]
    %v318 = vld [vmem:[%s4 + $0x4] sm:$0xf]
    %v321 = vunpack.c.l.b16 %v317
    %v322 = vunpack.c.l.b16 %v318
    %v323 = vpack.c.b16 %v322, %v321
    %vm325 = vcmask 130048
    %v327 = vsel %vm325, %v291, 0
    %v330 = vsel %vm325, %v292, 0
    %v333 = vsel %vm325, %v293, 0
    %v336 = vsel %vm325, %v294, 0
    %v339 = vsel %vm325, %v295, 0
    %v342 = vsel %vm325, %v296, 0
    %v345 = vsel %vm325, %v297, 0
    %v348 = vsel %vm325, %v298, 0
    %350 = vmatprep.subr.bf16.mxu0 0
    %351 = vmatpush1.bf16.msra.mxu0 %v323
    %352 = vmatprep.subr.bf16.mxu0 0
    %353 = vmatpush1.bf16.msra.mxu0 0
    %354 = vmatprep.subr.bf16.mxu0 0
    %355 = vmatpush1.bf16.msra.mxu0 0
    %356 = vmatprep.subr.bf16.mxu0 0
    %357 = vmatpush1.bf16.msra.mxu0 0
    %358 = vmatprep.subr.bf16.mxu0 0
    %359 = vmatpush1.bf16.msra.mxu0 0
    %360 = vmatprep.subr.bf16.mxu0 0
    %361 = vmatpush1.bf16.msra.mxu0 0
    %362 = vmatprep.subr.bf16.mxu0 0
    %363 = vmatpush1.bf16.msra.mxu0 0
    %364 = vmatprep.subr.bf16.mxu0 0
    %365 = vmatpush1.bf16.msra.mxu0 0
    %366 = vmatprep.subr.bf16.mxu0 0
    %367 = vmatpush1.bf16.msra.mxu0 0
    %368 = vmatprep.subr.bf16.mxu0 0
    %369 = vmatpush1.bf16.msra.mxu0 0
    %370 = vmatprep.subr.bf16.mxu0 0
    %371 = vmatpush1.bf16.msra.mxu0 0
    %372 = vmatprep.subr.bf16.mxu0 0
    %373 = vmatpush1.bf16.msra.mxu0 0
    %374 = vmatprep.subr.bf16.mxu0 0
    %375 = vmatpush1.bf16.msra.mxu0 0
    %376 = vmatprep.subr.bf16.mxu0 0
    %377 = vmatpush1.bf16.msra.mxu0 0
    %378 = vmatprep.subr.bf16.mxu0 0
    %379 = vmatpush1.bf16.msra.mxu0 0
    %380 = vmatprep.subr.bf16.mxu0 0
    %381 = vmatpush1.bf16.msra.mxu0 0
    %382 = vmatprep.mubr.bf16.mxu0 0
    %383 = vmatmul.mubr.bf16.gmra.mrb[0].mxu0 %v327
    %v384 = vpop.f32.mrb[0].mxu0
    %v385 = vadd.f32 0.0, %v384
    %v386 = vpop.f32.mrb[0].mxu0
    %v387 = vpop.f32.mrb[0].mxu0
    %v388 = vadd.f32 0.0, %v387
    %v389 = vpop.f32.mrb[0].mxu0
    %390 = vmatprep.mubr.bf16.mxu0 0
    %391 = vmatmul.mubr.bf16.gmra.mrb[0].mxu0 %v330
    %v392 = vpop.f32.mrb[0].mxu0
    %v393 = vadd.f32 0.0, %v392
    %v394 = vpop.f32.mrb[0].mxu0
    %v395 = vpop.f32.mrb[0].mxu0
    %v396 = vadd.f32 0.0, %v395
    %v397 = vpop.f32.mrb[0].mxu0
    %398 = vmatprep.mubr.bf16.mxu0 0
    %399 = vmatmul.mubr.bf16.gmra.mrb[0].mxu0 %v333
    %v400 = vpop.f32.mrb[0].mxu0
    %v401 = vadd.f32 0.0, %v400
    %v402 = vpop.f32.mrb[0].mxu0
    %v403 = vpop.f32.mrb[0].mxu0
    %v404 = vadd.f32 0.0, %v403
    %v405 = vpop.f32.mrb[0].mxu0
    %406 = vmatprep.mubr.bf16.mxu0 0
    %407 = vmatmul.mubr.bf16.gmra.mrb[0].mxu0 %v336
    %v408 = vpop.f32.mrb[0].mxu0
    %v409 = vadd.f32 0.0, %v408
    %v410 = vpop.f32.mrb[0].mxu0
    %v411 = vpop.f32.mrb[0].mxu0
    %v412 = vadd.f32 0.0, %v411
    %v413 = vpop.f32.mrb[0].mxu0
    %414 = vmatprep.mubr.bf16.mxu0 0
    %415 = vmatmul.mubr.bf16.gmra.mrb[0].mxu0 %v339
    %v416 = vpop.f32.mrb[0].mxu0
    %v417 = vadd.f32 0.0, %v416
    %v418 = vpop.f32.mrb[0].mxu0
    %v419 = vpop.f32.mrb[0].mxu0
    %v420 = vadd.f32 0.0, %v419
    %v421 = vpop.f32.mrb[0].mxu0
    %422 = vmatprep.mubr.bf16.mxu0 0
    %423 = vmatmul.mubr.bf16.gmra.mrb[0].mxu0 %v342
    %v424 = vpop.f32.mrb[0].mxu0
    %v425 = vadd.f32 0.0, %v424
    %v426 = vpop.f32.mrb[0].mxu0
    %v427 = vpop.f32.mrb[0].mxu0
    %v428 = vadd.f32 0.0, %v427
    %v429 = vpop.f32.mrb[0].mxu0
    %430 = vmatprep.mubr.bf16.mxu0 0
    %431 = vmatmul.mubr.bf16.gmra.mrb[0].mxu0 %v345
    %v432 = vpop.f32.mrb[0].mxu0
    %v433 = vadd.f32 0.0, %v432
    %v434 = vpop.f32.mrb[0].mxu0
    %v435 = vpop.f32.mrb[0].mxu0
    %v436 = vadd.f32 0.0, %v435
    %v437 = vpop.f32.mrb[0].mxu0
    %438 = vmatprep.mubr.bf16.mxu0 0
    %439 = vmatmul.mubr.bf16.gmra.mrb[0].mxu0 %v348
    %v440 = vpop.f32.mrb[0].mxu0
    %v441 = vadd.f32 0.0, %v440
    %v442 = vpop.f32.mrb[0].mxu0
    %v443 = vpop.f32.mrb[0].mxu0
    %v444 = vadd.f32 0.0, %v443
    %v445 = vpop.f32.mrb[0].mxu0
    %446 = vdwg.mxu0
    %v449 = vunpack.c.l.b16 %v315
    %v450 = vunpack.c.l.b16 %v316
    %v451 = vpack.c.b16 %v450, %v449
    %v454 = vsel %vm325, %v187, 0
    %v457 = vsel %vm325, %v188, 0
    %v460 = vsel %vm325, %v189, 0
    %v463 = vsel %vm325, %v190, 0
    %v466 = vsel %vm325, %v191, 0
    %v469 = vsel %vm325, %v192, 0
    %v472 = vsel %vm325, %v193, 0
    %v475 = vsel %vm325, %v194, 0
    %477 = vmatprep.subr.bf16.mxu0 0
    %478 = vmatpush1.bf16.msra.mxu0 %v451
    %479 = vmatprep.subr.bf16.mxu0 0
    %480 = vmatpush1.bf16.msra.mxu0 0
    %481 = vmatprep.subr.bf16.mxu0 0
    %482 = vmatpush1.bf16.msra.mxu0 0
    %483 = vmatprep.subr.bf16.mxu0 0
    %484 = vmatpush1.bf16.msra.mxu0 0
    %485 = vmatprep.subr.bf16.mxu0 0
    %486 = vmatpush1.bf16.msra.mxu0 0
    %487 = vmatprep.subr.bf16.mxu0 0
    %488 = vmatpush1.bf16.msra.mxu0 0
    %489 = vmatprep.subr.bf16.mxu0 0
    %490 = vmatpush1.bf16.msra.mxu0 0
    %491 = vmatprep.subr.bf16.mxu0 0
    %492 = vmatpush1.bf16.msra.mxu0 0
    %493 = vmatprep.subr.bf16.mxu0 0
    %494 = vmatpush1.bf16.msra.mxu0 0
    %495 = vmatprep.subr.bf16.mxu0 0
    %496 = vmatpush1.bf16.msra.mxu0 0
    %497 = vmatprep.subr.bf16.mxu0 0
    %498 = vmatpush1.bf16.msra.mxu0 0
    %499 = vmatprep.subr.bf16.mxu0 0
    %500 = vmatpush1.bf16.msra.mxu0 0
    %501 = vmatprep.subr.bf16.mxu0 0
    %502 = vmatpush1.bf16.msra.mxu0 0
    %503 = vmatprep.subr.bf16.mxu0 0
    %504 = vmatpush1.bf16.msra.mxu0 0
    %505 = vmatprep.subr.bf16.mxu0 0
    %506 = vmatpush1.bf16.msra.mxu0 0
    %507 = vmatprep.subr.bf16.mxu0 0
    %508 = vmatpush1.bf16.msra.mxu0 0
    %509 = vmatprep.mubr.bf16.mxu0 0
    %510 = vmatmul.mubr.bf16.gmra.mrb[0].mxu0 %v454
    %v511 = vpop.f32.mrb[0].mxu0
    %v512 = vadd.f32 %v385, %v511
    %v513 = vpop.f32.mrb[0].mxu0
    %v514 = vpop.f32.mrb[0].mxu0
    %v515 = vadd.f32 %v388, %v514
    %v516 = vpop.f32.mrb[0].mxu0
    %517 = vmatprep.mubr.bf16.mxu0 0
    %518 = vmatmul.mubr.bf16.gmra.mrb[0].mxu0 %v457
    %v519 = vpop.f32.mrb[0].mxu0
    %v520 = vadd.f32 %v393, %v519
    %v521 = vpop.f32.mrb[0].mxu0
    %v522 = vpop.f32.mrb[0].mxu0
    %v523 = vadd.f32 %v396, %v522
    %v524 = vpop.f32.mrb[0].mxu0
    %525 = vmatprep.mubr.bf16.mxu0 0
    %526 = vmatmul.mubr.bf16.gmra.mrb[0].mxu0 %v460
    %v527 = vpop.f32.mrb[0].mxu0
    %v528 = vadd.f32 %v401, %v527
    %v529 = vpop.f32.mrb[0].mxu0
    %v530 = vpop.f32.mrb[0].mxu0
    %v531 = vadd.f32 %v404, %v530
    %v532 = vpop.f32.mrb[0].mxu0
    %533 = vmatprep.mubr.bf16.mxu0 0
    %534 = vmatmul.mubr.bf16.gmra.mrb[0].mxu0 %v463
    %v535 = vpop.f32.mrb[0].mxu0
    %v536 = vadd.f32 %v409, %v535
    %v537 = vpop.f32.mrb[0].mxu0
    %v538 = vpop.f32.mrb[0].mxu0
    %v539 = vadd.f32 %v412, %v538
    %v540 = vpop.f32.mrb[0].mxu0
    %541 = vmatprep.mubr.bf16.mxu0 0
    %542 = vmatmul.mubr.bf16.gmra.mrb[0].mxu0 %v466
    %v543 = vpop.f32.mrb[0].mxu0
    %v544 = vadd.f32 %v417, %v543
    %v545 = vpop.f32.mrb[0].mxu0
    %v546 = vpop.f32.mrb[0].mxu0
    %v547 = vadd.f32 %v420, %v546
    %v548 = vpop.f32.mrb[0].mxu0
    %549 = vmatprep.mubr.bf16.mxu0 0
    %550 = vmatmul.mubr.bf16.gmra.mrb[0].mxu0 %v469
    %v551 = vpop.f32.mrb[0].mxu0
    %v552 = vadd.f32 %v425, %v551
    %v553 = vpop.f32.mrb[0].mxu0
    %v554 = vpop.f32.mrb[0].mxu0
    %v555 = vadd.f32 %v428, %v554
    %v556 = vpop.f32.mrb[0].mxu0
    %557 = vmatprep.mubr.bf16.mxu0 0
    %558 = vmatmul.mubr.bf16.gmra.mrb[0].mxu0 %v472
    %v559 = vpop.f32.mrb[0].mxu0
    %v560 = vadd.f32 %v433, %v559
    %v561 = vpop.f32.mrb[0].mxu0
    %v562 = vpop.f32.mrb[0].mxu0
    %v563 = vadd.f32 %v436, %v562
    %v564 = vpop.f32.mrb[0].mxu0
    %565 = vmatprep.mubr.bf16.mxu0 0
    %566 = vmatmul.mubr.bf16.gmra.mrb[0].mxu0 %v475
    %v567 = vpop.f32.mrb[0].mxu0
    %v568 = vadd.f32 %v441, %v567
    %v569 = vpop.f32.mrb[0].mxu0
    %v570 = vpop.f32.mrb[0].mxu0
    %v571 = vadd.f32 %v444, %v570
    %v572 = vpop.f32.mrb[0].mxu0
    %573 = vdwg.mxu0
    %v574 = vld [vmem:[%s5] sm:$0x1]
    %576 = vset.pattern.permute.xlu0 3
    %577 = vperm.xlu0 %576, %v299
    %v578 = vpop.permute.xlu0 %577
    %581 = vset.pattern.permute.xlu0 3
    %582 = vperm.xlu0 %581, %v300
    %v583 = vpop.permute.xlu0 %582
    %586 = vset.pattern.permute.xlu0 3
    %587 = vperm.xlu0 %586, %v301
    %v588 = vpop.permute.xlu0 %587
    %591 = vset.pattern.permute.xlu0 3
    %592 = vperm.xlu0 %591, %v302
    %v593 = vpop.permute.xlu0 %592
    %596 = vset.pattern.permute.xlu0 3
    %597 = vperm.xlu0 %596, %v303
    %v598 = vpop.permute.xlu0 %597
    %601 = vset.pattern.permute.xlu0 3
    %602 = vperm.xlu0 %601, %v304
    %v603 = vpop.permute.xlu0 %602
    %606 = vset.pattern.permute.xlu0 3
    %607 = vperm.xlu0 %606, %v305
    %v608 = vpop.permute.xlu0 %607
    %611 = vset.pattern.permute.xlu0 3
    %612 = vperm.xlu0 %611, %v306
    %v613 = vpop.permute.xlu0 %612
    %616 = vset.pattern.permute.xlu0 3
    %617 = vperm.xlu0 %616, %v307
    %v618 = vpop.permute.xlu0 %617
    %621 = vset.pattern.permute.xlu0 3
    %622 = vperm.xlu0 %621, %v308
    %v623 = vpop.permute.xlu0 %622
    %626 = vset.pattern.permute.xlu0 3
    %627 = vperm.xlu0 %626, %v309
    %v628 = vpop.permute.xlu0 %627
    %631 = vset.pattern.permute.xlu0 3
    %632 = vperm.xlu0 %631, %v310
    %v633 = vpop.permute.xlu0 %632
    %636 = vset.pattern.permute.xlu0 3
    %637 = vperm.xlu0 %636, %v311
    %v638 = vpop.permute.xlu0 %637
    %641 = vset.pattern.permute.xlu0 3
    %642 = vperm.xlu0 %641, %v312
    %v643 = vpop.permute.xlu0 %642
    %646 = vset.pattern.permute.xlu0 3
    %647 = vperm.xlu0 %646, %v313
    %v648 = vpop.permute.xlu0 %647
    %651 = vset.pattern.permute.xlu0 3
    %652 = vperm.xlu0 %651, %v314
    %v653 = vpop.permute.xlu0 %652
    %v656 = vlaneseq
    %v657 = vshrl.u32 %v656, 7
    %v658 = vsub.s32 0, %v657
    %v659 = vrot.slane %v574, %v658
    %v661 = vmul.f32 %v578, %v659
    %v662 = vmul.f32 %v583, %v659
    %v663 = vmul.f32 %v588, %v659
    %v664 = vmul.f32 %v593, %v659
    %v665 = vmul.f32 %v598, %v659
    %v666 = vmul.f32 %v603, %v659
    %v667 = vmul.f32 %v608, %v659
    %v668 = vmul.f32 %v613, %v659
    %v669 = vmul.f32 %v618, %v659
    %v670 = vmul.f32 %v623, %v659
    %v671 = vmul.f32 %v628, %v659
    %v672 = vmul.f32 %v633, %v659
    %v673 = vmul.f32 %v638, %v659
    %v674 = vmul.f32 %v643, %v659
    %v675 = vmul.f32 %v648, %v659
    %v676 = vmul.f32 %v653, %v659
    %v677 = vadd.f32 %v512, %v661
    %v678 = vadd.f32 %v515, %v662
    %v679 = vadd.f32 %v520, %v663
    %v680 = vadd.f32 %v523, %v664
    %v681 = vadd.f32 %v528, %v665
    %v682 = vadd.f32 %v531, %v666
    %v683 = vadd.f32 %v536, %v667
    %v684 = vadd.f32 %v539, %v668
    %v685 = vadd.f32 %v544, %v669
    %v686 = vadd.f32 %v547, %v670
    %v687 = vadd.f32 %v552, %v671
    %v688 = vadd.f32 %v555, %v672
    %v689 = vadd.f32 %v560, %v673
    %v690 = vadd.f32 %v563, %v674
    %v691 = vadd.f32 %v568, %v675
    %v692 = vadd.f32 %v571, %v676
    %v693 = vld [vmem:[%s6] sm:$0x1]
    %v695 = vlaneseq
    %v696 = vshrl.u32 %v695, 7
    %v697 = vsub.s32 0, %v696
    %v698 = vrot.slane %v693, %v697
    %v700 = vadd.f32 %v677, %v698
    %v701 = vadd.f32 %v678, %v698
    %v702 = vadd.f32 %v679, %v698
    %v703 = vadd.f32 %v680, %v698
    %v704 = vadd.f32 %v681, %v698
    %v705 = vadd.f32 %v682, %v698
    %v706 = vadd.f32 %v683, %v698
    %v707 = vadd.f32 %v684, %v698
    %v708 = vadd.f32 %v685, %v698
    %v709 = vadd.f32 %v686, %v698
    %v710 = vadd.f32 %v687, %v698
    %v711 = vadd.f32 %v688, %v698
    %v712 = vadd.f32 %v689, %v698
    %v713 = vadd.f32 %v690, %v698
    %v714 = vadd.f32 %v691, %v698
    %v715 = vadd.f32 %v692, %v698
    %v716 = vmax.f32 %v700, 0.0
    %v717 = vmax.f32 %v701, 0.0
    %v718 = vmax.f32 %v702, 0.0
    %v719 = vmax.f32 %v703, 0.0
    %v720 = vmax.f32 %v704, 0.0
    %v721 = vmax.f32 %v705, 0.0
    %v722 = vmax.f32 %v706, 0.0
    %v723 = vmax.f32 %v707, 0.0
    %v724 = vmax.f32 %v708, 0.0
    %v725 = vmax.f32 %v709, 0.0
    %v726 = vmax.f32 %v710, 0.0
    %v727 = vmax.f32 %v711, 0.0
    %v728 = vmax.f32 %v712, 0.0
    %v729 = vmax.f32 %v713, 0.0
    %v730 = vmax.f32 %v714, 0.0
    %v731 = vmax.f32 %v715, 0.0
    %v732 = vpack.c.bf16 %v717, %v716
    %v733 = vpack.c.bf16 %v719, %v718
    %v734 = vpack.c.bf16 %v721, %v720
    %v735 = vpack.c.bf16 %v723, %v722
    %v736 = vpack.c.bf16 %v725, %v724
    %v737 = vpack.c.bf16 %v727, %v726
    %v738 = vpack.c.bf16 %v729, %v728
    %v739 = vpack.c.bf16 %v731, %v730
    %v740 = vld [vmem:[%s7] sm:$0xf]
    %v741 = vld [vmem:[%s7 + $0x4] sm:$0xf]
    %v742 = vld [vmem:[%s7 + $0x8] sm:$0xf]
    %v743 = vld [vmem:[%s7 + $0xc] sm:$0xf]
    %v744 = vld [vmem:[%s8] sm:$0x1]
    %v746 = vlaneseq
    %v747 = vshrl.u32 %v746, 7
    %v748 = vsub.s32 0, %v747
    %v749 = vrot.slane %v744, %v748
    %v755 = vunpack.c.l.b16 %v740
    %v756 = vunpack.c.l.b16 %v741
    %v757 = vunpack.c.l.b16 %v742
    %v758 = vunpack.c.l.b16 %v743
    %v759 = vpack.c.b16 %v756, %v755
    %v760 = vpack.c.b16 %v758, %v757
    %vm763 = vcmask 261120
    %v765 = vsel %vm763, %v732, 0
    %v768 = vsel %vm763, %v733, 0
    %v771 = vsel %vm763, %v734, 0
    %v774 = vsel %vm763, %v735, 0
    %v777 = vsel %vm763, %v736, 0
    %v780 = vsel %vm763, %v737, 0
    %v783 = vsel %vm763, %v738, 0
    %v786 = vsel %vm763, %v739, 0
    %788 = vmatprep.subr.bf16.mxu0 0
    %789 = vmatpush1.bf16.msra.mxu0 %v759
    %790 = vmatprep.subr.bf16.mxu0 0
    %791 = vmatpush1.bf16.msra.mxu0 %v760
    %792 = vmatprep.subr.bf16.mxu0 0
    %793 = vmatpush1.bf16.msra.mxu0 0
    %794 = vmatprep.subr.bf16.mxu0 0
    %795 = vmatpush1.bf16.msra.mxu0 0
    %796 = vmatprep.subr.bf16.mxu0 0
    %797 = vmatpush1.bf16.msra.mxu0 0
    %798 = vmatprep.subr.bf16.mxu0 0
    %799 = vmatpush1.bf16.msra.mxu0 0
    %800 = vmatprep.subr.bf16.mxu0 0
    %801 = vmatpush1.bf16.msra.mxu0 0
    %802 = vmatprep.subr.bf16.mxu0 0
    %803 = vmatpush1.bf16.msra.mxu0 0
    %804 = vmatprep.subr.bf16.mxu0 0
    %805 = vmatpush1.bf16.msra.mxu0 0
    %806 = vmatprep.subr.bf16.mxu0 0
    %807 = vmatpush1.bf16.msra.mxu0 0
    %808 = vmatprep.subr.bf16.mxu0 0
    %809 = vmatpush1.bf16.msra.mxu0 0
    %810 = vmatprep.subr.bf16.mxu0 0
    %811 = vmatpush1.bf16.msra.mxu0 0
    %812 = vmatprep.subr.bf16.mxu0 0
    %813 = vmatpush1.bf16.msra.mxu0 0
    %814 = vmatprep.subr.bf16.mxu0 0
    %815 = vmatpush1.bf16.msra.mxu0 0
    %816 = vmatprep.subr.bf16.mxu0 0
    %817 = vmatpush1.bf16.msra.mxu0 0
    %818 = vmatprep.subr.bf16.mxu0 0
    %819 = vmatpush1.bf16.msra.mxu0 0
    %820 = vmatprep.mubr.bf16.mxu0 0
    %821 = vmatmul.mubr.bf16.gmra.mrb[0].mxu0 %v765
    %v822 = vpop.f32.mrb[0].mxu0
    %v823 = vadd.f32 %v749, %v822
    %v824 = vpop.f32.mrb[0].mxu0
    %v825 = vpop.f32.mrb[0].mxu0
    %v826 = vadd.f32 %v749, %v825
    %v827 = vpop.f32.mrb[0].mxu0
    %828 = vmatprep.mubr.bf16.mxu0 0
    %829 = vmatmul.mubr.bf16.gmra.mrb[0].mxu0 %v768
    %v830 = vpop.f32.mrb[0].mxu0
    %v831 = vadd.f32 %v749, %v830
    %v832 = vpop.f32.mrb[0].mxu0
    %v833 = vpop.f32.mrb[0].mxu0
    %v834 = vadd.f32 %v749, %v833
    %v835 = vpop.f32.mrb[0].mxu0
    %836 = vmatprep.mubr.bf16.mxu0 0
    %837 = vmatmul.mubr.bf16.gmra.mrb[0].mxu0 %v771
    %v838 = vpop.f32.mrb[0].mxu0
    %v839 = vadd.f32 %v749, %v838
    %v840 = vpop.f32.mrb[0].mxu0
    %v841 = vpop.f32.mrb[0].mxu0
    %v842 = vadd.f32 %v749, %v841
    %v843 = vpop.f32.mrb[0].mxu0
    %844 = vmatprep.mubr.bf16.mxu0 0
    %845 = vmatmul.mubr.bf16.gmra.mrb[0].mxu0 %v774
    %v846 = vpop.f32.mrb[0].mxu0
    %v847 = vadd.f32 %v749, %v846
    %v848 = vpop.f32.mrb[0].mxu0
    %v849 = vpop.f32.mrb[0].mxu0
    %v850 = vadd.f32 %v749, %v849
    %v851 = vpop.f32.mrb[0].mxu0
    %852 = vmatprep.mubr.bf16.mxu0 0
    %853 = vmatmul.mubr.bf16.gmra.mrb[0].mxu0 %v777
    %v854 = vpop.f32.mrb[0].mxu0
    %v855 = vadd.f32 %v749, %v854
    %v856 = vpop.f32.mrb[0].mxu0
    %v857 = vpop.f32.mrb[0].mxu0
    %v858 = vadd.f32 %v749, %v857
    %v859 = vpop.f32.mrb[0].mxu0
    %860 = vmatprep.mubr.bf16.mxu0 0
    %861 = vmatmul.mubr.bf16.gmra.mrb[0].mxu0 %v780
    %v862 = vpop.f32.mrb[0].mxu0
    %v863 = vadd.f32 %v749, %v862
    %v864 = vpop.f32.mrb[0].mxu0
    %v865 = vpop.f32.mrb[0].mxu0
    %v866 = vadd.f32 %v749, %v865
    %v867 = vpop.f32.mrb[0].mxu0
    %868 = vmatprep.mubr.bf16.mxu0 0
    %869 = vmatmul.mubr.bf16.gmra.mrb[0].mxu0 %v783
    %v870 = vpop.f32.mrb[0].mxu0
    %v871 = vadd.f32 %v749, %v870
    %v872 = vpop.f32.mrb[0].mxu0
    %v873 = vpop.f32.mrb[0].mxu0
    %v874 = vadd.f32 %v749, %v873
    %v875 = vpop.f32.mrb[0].mxu0
    %876 = vmatprep.mubr.bf16.mxu0 0
    %877 = vmatmul.mubr.bf16.gmra.mrb[0].mxu0 %v786
    %v878 = vpop.f32.mrb[0].mxu0
    %v879 = vadd.f32 %v749, %v878
    %v880 = vpop.f32.mrb[0].mxu0
    %v881 = vpop.f32.mrb[0].mxu0
    %v882 = vadd.f32 %v749, %v881
    %v883 = vpop.f32.mrb[0].mxu0
    %884 = vdwg.mxu0
    %v885 = vmax.f32 %v823, 0.0
    %v886 = vmax.f32 %v826, 0.0
    %v887 = vmax.f32 %v831, 0.0
    %v888 = vmax.f32 %v834, 0.0
    %v889 = vmax.f32 %v839, 0.0
    %v890 = vmax.f32 %v842, 0.0
    %v891 = vmax.f32 %v847, 0.0
    %v892 = vmax.f32 %v850, 0.0
    %v893 = vmax.f32 %v855, 0.0
    %v894 = vmax.f32 %v858, 0.0
    %v895 = vmax.f32 %v863, 0.0
    %v896 = vmax.f32 %v866, 0.0
    %v897 = vmax.f32 %v871, 0.0
    %v898 = vmax.f32 %v874, 0.0
    %v899 = vmax.f32 %v879, 0.0
    %v900 = vmax.f32 %v882, 0.0
    %v901 = vpack.c.bf16 %v886, %v885
    %v902 = vpack.c.bf16 %v888, %v887
    %v903 = vpack.c.bf16 %v890, %v889
    %v904 = vpack.c.bf16 %v892, %v891
    %v905 = vpack.c.bf16 %v894, %v893
    %v906 = vpack.c.bf16 %v896, %v895
    %v907 = vpack.c.bf16 %v898, %v897
    %v908 = vpack.c.bf16 %v900, %v899
    %v909 = vld [vmem:[%s9] sm:$0xf]
    %v910 = vld [vmem:[%s9 + $0x4] sm:$0xf]
    %v911 = vld [vmem:[%s9 + $0x8] sm:$0xf]
    %v912 = vld [vmem:[%s9 + $0xc] sm:$0xf]
    %v913 = vld [vmem:[%s10] sm:$0x1]
    %v915 = vlaneseq
    %v916 = vshrl.u32 %v915, 7
    %v917 = vsub.s32 0, %v916
    %v918 = vrot.slane %v913, %v917
    %v924 = vunpack.c.l.b16 %v909
    %v925 = vunpack.c.l.b16 %v910
    %v926 = vunpack.c.l.b16 %v911
    %v927 = vunpack.c.l.b16 %v912
    %v928 = vpack.c.b16 %v925, %v924
    %v929 = vpack.c.b16 %v927, %v926
    %v933 = vsel %vm763, %v901, 0
    %v936 = vsel %vm763, %v902, 0
    %v939 = vsel %vm763, %v903, 0
    %v942 = vsel %vm763, %v904, 0
    %v945 = vsel %vm763, %v905, 0
    %v948 = vsel %vm763, %v906, 0
    %v951 = vsel %vm763, %v907, 0
    %v954 = vsel %vm763, %v908, 0
    %956 = vmatprep.subr.bf16.mxu0 0
    %957 = vmatpush1.bf16.msra.mxu0 %v928
    %958 = vmatprep.subr.bf16.mxu0 0
    %959 = vmatpush1.bf16.msra.mxu0 %v929
    %960 = vmatprep.subr.bf16.mxu0 0
    %961 = vmatpush1.bf16.msra.mxu0 0
    %962 = vmatprep.subr.bf16.mxu0 0
    %963 = vmatpush1.bf16.msra.mxu0 0
    %964 = vmatprep.subr.bf16.mxu0 0
    %965 = vmatpush1.bf16.msra.mxu0 0
    %966 = vmatprep.subr.bf16.mxu0 0
    %967 = vmatpush1.bf16.msra.mxu0 0
    %968 = vmatprep.subr.bf16.mxu0 0
    %969 = vmatpush1.bf16.msra.mxu0 0
    %970 = vmatprep.subr.bf16.mxu0 0
    %971 = vmatpush1.bf16.msra.mxu0 0
    %972 = vmatprep.subr.bf16.mxu0 0
    %973 = vmatpush1.bf16.msra.mxu0 0
    %974 = vmatprep.subr.bf16.mxu0 0
    %975 = vmatpush1.bf16.msra.mxu0 0
    %976 = vmatprep.subr.bf16.mxu0 0
    %977 = vmatpush1.bf16.msra.mxu0 0
    %978 = vmatprep.subr.bf16.mxu0 0
    %979 = vmatpush1.bf16.msra.mxu0 0
    %980 = vmatprep.subr.bf16.mxu0 0
    %981 = vmatpush1.bf16.msra.mxu0 0
    %982 = vmatprep.subr.bf16.mxu0 0
    %983 = vmatpush1.bf16.msra.mxu0 0
    %984 = vmatprep.subr.bf16.mxu0 0
    %985 = vmatpush1.bf16.msra.mxu0 0
    %986 = vmatprep.subr.bf16.mxu0 0
    %987 = vmatpush1.bf16.msra.mxu0 0
    %988 = vmatprep.mubr.bf16.mxu0 0
    %989 = vmatmul.mubr.bf16.gmra.mrb[0].mxu0 %v933
    %v990 = vpop.f32.mrb[0].mxu0
    %v991 = vadd.f32 %v918, %v990
    %v992 = vpop.f32.mrb[0].mxu0
    %v993 = vpop.f32.mrb[0].mxu0
    %v994 = vadd.f32 %v918, %v993
    %v995 = vpop.f32.mrb[0].mxu0
    %996 = vmatprep.mubr.bf16.mxu0 0
    %997 = vmatmul.mubr.bf16.gmra.mrb[0].mxu0 %v936
    %v998 = vpop.f32.mrb[0].mxu0
    %v999 = vadd.f32 %v918, %v998
    %v1000 = vpop.f32.mrb[0].mxu0
    %v1001 = vpop.f32.mrb[0].mxu0
    %v1002 = vadd.f32 %v918, %v1001
    %v1003 = vpop.f32.mrb[0].mxu0
    %1004 = vmatprep.mubr.bf16.mxu0 0
    %1005 = vmatmul.mubr.bf16.gmra.mrb[0].mxu0 %v939
    %v1006 = vpop.f32.mrb[0].mxu0
    %v1007 = vadd.f32 %v918, %v1006
    %v1008 = vpop.f32.mrb[0].mxu0
    %v1009 = vpop.f32.mrb[0].mxu0
    %v1010 = vadd.f32 %v918, %v1009
    %v1011 = vpop.f32.mrb[0].mxu0
    %1012 = vmatprep.mubr.bf16.mxu0 0
    %1013 = vmatmul.mubr.bf16.gmra.mrb[0].mxu0 %v942
    %v1014 = vpop.f32.mrb[0].mxu0
    %v1015 = vadd.f32 %v918, %v1014
    %v1016 = vpop.f32.mrb[0].mxu0
    %v1017 = vpop.f32.mrb[0].mxu0
    %v1018 = vadd.f32 %v918, %v1017
    %v1019 = vpop.f32.mrb[0].mxu0
    %1020 = vmatprep.mubr.bf16.mxu0 0
    %1021 = vmatmul.mubr.bf16.gmra.mrb[0].mxu0 %v945
    %v1022 = vpop.f32.mrb[0].mxu0
    %v1023 = vadd.f32 %v918, %v1022
    %v1024 = vpop.f32.mrb[0].mxu0
    %v1025 = vpop.f32.mrb[0].mxu0
    %v1026 = vadd.f32 %v918, %v1025
    %v1027 = vpop.f32.mrb[0].mxu0
    %1028 = vmatprep.mubr.bf16.mxu0 0
    %1029 = vmatmul.mubr.bf16.gmra.mrb[0].mxu0 %v948
    %v1030 = vpop.f32.mrb[0].mxu0
    %v1031 = vadd.f32 %v918, %v1030
    %v1032 = vpop.f32.mrb[0].mxu0
    %v1033 = vpop.f32.mrb[0].mxu0
    %v1034 = vadd.f32 %v918, %v1033
    %v1035 = vpop.f32.mrb[0].mxu0
    %1036 = vmatprep.mubr.bf16.mxu0 0
    %1037 = vmatmul.mubr.bf16.gmra.mrb[0].mxu0 %v951
    %v1038 = vpop.f32.mrb[0].mxu0
    %v1039 = vadd.f32 %v918, %v1038
    %v1040 = vpop.f32.mrb[0].mxu0
    %v1041 = vpop.f32.mrb[0].mxu0
    %v1042 = vadd.f32 %v918, %v1041
    %v1043 = vpop.f32.mrb[0].mxu0
    %1044 = vmatprep.mubr.bf16.mxu0 0
    %1045 = vmatmul.mubr.bf16.gmra.mrb[0].mxu0 %v954
    %v1046 = vpop.f32.mrb[0].mxu0
    %v1047 = vadd.f32 %v918, %v1046
    %v1048 = vpop.f32.mrb[0].mxu0
    %v1049 = vpop.f32.mrb[0].mxu0
    %v1050 = vadd.f32 %v918, %v1049
    %v1051 = vpop.f32.mrb[0].mxu0
    %1052 = vdwg.mxu0
    %v1053 = vmax.f32 %v991, 0.0
    %v1054 = vmax.f32 %v994, 0.0
    %v1055 = vmax.f32 %v999, 0.0
    %v1056 = vmax.f32 %v1002, 0.0
    %v1057 = vmax.f32 %v1007, 0.0
    %v1058 = vmax.f32 %v1010, 0.0
    %v1059 = vmax.f32 %v1015, 0.0
    %v1060 = vmax.f32 %v1018, 0.0
    %v1061 = vmax.f32 %v1023, 0.0
    %v1062 = vmax.f32 %v1026, 0.0
    %v1063 = vmax.f32 %v1031, 0.0
    %v1064 = vmax.f32 %v1034, 0.0
    %v1065 = vmax.f32 %v1039, 0.0
    %v1066 = vmax.f32 %v1042, 0.0
    %v1067 = vmax.f32 %v1047, 0.0
    %v1068 = vmax.f32 %v1050, 0.0
    %v1069 = vld [vmem:[%s11] sm:$0x1]
    %v1071 = vlaneseq
    %v1072 = vshrl.u32 %v1071, 7
    %v1073 = vsub.s32 0, %v1072
    %v1074 = vrot.slane %v1069, %v1073
    %v1076 = vmul.f32 %v1053, %v1074
    %v1077 = vmul.f32 %v1054, %v1074
    %v1078 = vmul.f32 %v1055, %v1074
    %v1079 = vmul.f32 %v1056, %v1074
    %v1080 = vmul.f32 %v1057, %v1074
    %v1081 = vmul.f32 %v1058, %v1074
    %v1082 = vmul.f32 %v1059, %v1074
    %v1083 = vmul.f32 %v1060, %v1074
    %v1084 = vmul.f32 %v1061, %v1074
    %v1085 = vmul.f32 %v1062, %v1074
    %v1086 = vmul.f32 %v1063, %v1074
    %v1087 = vmul.f32 %v1064, %v1074
    %v1088 = vmul.f32 %v1065, %v1074
    %v1089 = vmul.f32 %v1066, %v1074
    %v1090 = vmul.f32 %v1067, %v1074
    %v1091 = vmul.f32 %v1068, %v1074
    %v1092 = vsel %vm763, %v1076, 0.0
    %1093 = vadd.xlane.f32.xlu0 %v1092
    %v1094 = vpop.xlane.xlu0 %1093
    %v1095 = vsel %vm763, %v1077, 0.0
    %1096 = vadd.xlane.f32.xlu0 %v1095
    %v1097 = vpop.xlane.xlu0 %1096
    %v1098 = vsel %vm763, %v1078, 0.0
    %1099 = vadd.xlane.f32.xlu0 %v1098
    %v1100 = vpop.xlane.xlu0 %1099
    %v1101 = vsel %vm763, %v1079, 0.0
    %1102 = vadd.xlane.f32.xlu0 %v1101
    %v1103 = vpop.xlane.xlu0 %1102
    %v1104 = vsel %vm763, %v1080, 0.0
    %1105 = vadd.xlane.f32.xlu0 %v1104
    %v1106 = vpop.xlane.xlu0 %1105
    %v1107 = vsel %vm763, %v1081, 0.0
    %1108 = vadd.xlane.f32.xlu0 %v1107
    %v1109 = vpop.xlane.xlu0 %1108
    %v1110 = vsel %vm763, %v1082, 0.0
    %1111 = vadd.xlane.f32.xlu0 %v1110
    %v1112 = vpop.xlane.xlu0 %1111
    %v1113 = vsel %vm763, %v1083, 0.0
    %1114 = vadd.xlane.f32.xlu0 %v1113
    %v1115 = vpop.xlane.xlu0 %1114
    %v1116 = vsel %vm763, %v1084, 0.0
    %1117 = vadd.xlane.f32.xlu0 %v1116
    %v1118 = vpop.xlane.xlu0 %1117
    %v1119 = vsel %vm763, %v1085, 0.0
    %1120 = vadd.xlane.f32.xlu0 %v1119
    %v1121 = vpop.xlane.xlu0 %1120
    %v1122 = vsel %vm763, %v1086, 0.0
    %1123 = vadd.xlane.f32.xlu0 %v1122
    %v1124 = vpop.xlane.xlu0 %1123
    %v1125 = vsel %vm763, %v1087, 0.0
    %1126 = vadd.xlane.f32.xlu0 %v1125
    %v1127 = vpop.xlane.xlu0 %1126
    %v1128 = vsel %vm763, %v1088, 0.0
    %1129 = vadd.xlane.f32.xlu0 %v1128
    %v1130 = vpop.xlane.xlu0 %1129
    %v1131 = vsel %vm763, %v1089, 0.0
    %1132 = vadd.xlane.f32.xlu0 %v1131
    %v1133 = vpop.xlane.xlu0 %1132
    %v1134 = vsel %vm763, %v1090, 0.0
    %1135 = vadd.xlane.f32.xlu0 %v1134
    %v1136 = vpop.xlane.xlu0 %1135
    %v1137 = vsel %vm763, %v1091, 0.0
    %1138 = vadd.xlane.f32.xlu0 %v1137
    %v1139 = vpop.xlane.xlu0 %1138
    %v1140 = vmul.f32 %v299, %v1094
    %v1141 = vmul.f32 %v300, %v1097
    %v1142 = vmul.f32 %v301, %v1100
    %v1143 = vmul.f32 %v302, %v1103
    %v1144 = vmul.f32 %v303, %v1106
    %v1145 = vmul.f32 %v304, %v1109
    %v1146 = vmul.f32 %v305, %v1112
    %v1147 = vmul.f32 %v306, %v1115
    %v1148 = vmul.f32 %v307, %v1118
    %v1149 = vmul.f32 %v308, %v1121
    %v1150 = vmul.f32 %v309, %v1124
    %v1151 = vmul.f32 %v310, %v1127
    %v1152 = vmul.f32 %v311, %v1130
    %v1153 = vmul.f32 %v312, %v1133
    %v1154 = vmul.f32 %v313, %v1136
    %v1155 = vmul.f32 %v314, %v1139
    %v1156 = vmax.f32 %v1140, -100.0
    %v1157 = vmax.f32 %v1141, -100.0
    %v1158 = vmax.f32 %v1142, -100.0
    %v1159 = vmax.f32 %v1143, -100.0
    %v1160 = vmax.f32 %v1144, -100.0
    %v1161 = vmax.f32 %v1145, -100.0
    %v1162 = vmax.f32 %v1146, -100.0
    %v1163 = vmax.f32 %v1147, -100.0
    %v1164 = vmax.f32 %v1148, -100.0
    %v1165 = vmax.f32 %v1149, -100.0
    %v1166 = vmax.f32 %v1150, -100.0
    %v1167 = vmax.f32 %v1151, -100.0
    %v1168 = vmax.f32 %v1152, -100.0
    %v1169 = vmax.f32 %v1153, -100.0
    %v1170 = vmax.f32 %v1154, -100.0
    %v1171 = vmax.f32 %v1155, -100.0
    %v1172 = vmin.f32 %v1156, 100.0
    %v1173 = vmin.f32 %v1157, 100.0
    %v1174 = vmin.f32 %v1158, 100.0
    %v1175 = vmin.f32 %v1159, 100.0
    %v1176 = vmin.f32 %v1160, 100.0
    %v1177 = vmin.f32 %v1161, 100.0
    %v1178 = vmin.f32 %v1162, 100.0
    %v1179 = vmin.f32 %v1163, 100.0
    %v1180 = vmin.f32 %v1164, 100.0
    %v1181 = vmin.f32 %v1165, 100.0
    %v1182 = vmin.f32 %v1166, 100.0
    %v1183 = vmin.f32 %v1167, 100.0
    %v1184 = vmin.f32 %v1168, 100.0
    %v1185 = vmin.f32 %v1169, 100.0
    %v1186 = vmin.f32 %v1170, 100.0
    %v1187 = vmin.f32 %v1171, 100.0
    %1188 = vst.msk [vmem:[#allocation3] sm:$0xff] %vm763, %v901
    %1189 = vst.msk [vmem:[#allocation3 + $0x8] sm:$0xff] %vm763, %v902
    %1190 = vst.msk [vmem:[#allocation3 + $0x10] sm:$0xff] %vm763, %v903
    %1191 = vst.msk [vmem:[#allocation3 + $0x18] sm:$0xff] %vm763, %v904
    %1192 = vst.msk [vmem:[#allocation3 + $0x20] sm:$0xff] %vm763, %v905
    %1193 = vst.msk [vmem:[#allocation3 + $0x28] sm:$0xff] %vm763, %v906
    %1194 = vst.msk [vmem:[#allocation3 + $0x30] sm:$0xff] %vm763, %v907
    %1195 = vst.msk [vmem:[#allocation3 + $0x38] sm:$0xff] %vm763, %v908
    %v1196 = vpack.c.bf16 %v1173, %v1172
    %v1197 = vpack.c.bf16 %v1175, %v1174
    %v1198 = vpack.c.bf16 %v1177, %v1176
    %v1199 = vpack.c.bf16 %v1179, %v1178
    %v1200 = vpack.c.bf16 %v1181, %v1180
    %v1201 = vpack.c.bf16 %v1183, %v1182
    %v1202 = vpack.c.bf16 %v1185, %v1184
    %v1203 = vpack.c.bf16 %v1187, %v1186
    %1212 = vrot.lane.b32.xlu0 %v1196, 32
    %v1213 = vpop.permute.xlu0 %1212
    %1214 = vrot.lane.b32.xlu0 %v1197, 32
    %v1215 = vpop.permute.xlu0 %1214
    %1216 = vrot.lane.b32.xlu0 %v1198, 32
    %v1217 = vpop.permute.xlu0 %1216
    %1218 = vrot.lane.b32.xlu0 %v1199, 32
    %v1219 = vpop.permute.xlu0 %1218
    %1220 = vrot.lane.b32.xlu0 %v1200, 32
    %v1221 = vpop.permute.xlu0 %1220
    %1222 = vrot.lane.b32.xlu0 %v1201, 32
    %v1223 = vpop.permute.xlu0 %1222
    %1224 = vrot.lane.b32.xlu0 %v1202, 32
    %v1225 = vpop.permute.xlu0 %1224
    %1226 = vrot.lane.b32.xlu0 %v1203, 32
    %v1227 = vpop.permute.xlu0 %1226
    %vm1236 = vcmask 285952
    %1237 = vst.msk [vmem:[#allocation3] sm:$0xff] %vm1236, %v1213
    %1238 = vst.msk [vmem:[#allocation3 + $0x8] sm:$0xff] %vm1236, %v1215
    %1239 = vst.msk [vmem:[#allocation3 + $0x10] sm:$0xff] %vm1236, %v1217
    %1240 = vst.msk [vmem:[#allocation3 + $0x18] sm:$0xff] %vm1236, %v1219
    %1241 = vst.msk [vmem:[#allocation3 + $0x20] sm:$0xff] %vm1236, %v1221
    %1242 = vst.msk [vmem:[#allocation3 + $0x28] sm:$0xff] %vm1236, %v1223
    %1243 = vst.msk [vmem:[#allocation3 + $0x30] sm:$0xff] %vm1236, %v1225
    %1244 = vst.msk [vmem:[#allocation3 + $0x38] sm:$0xff] %vm1236, %v1227
    %v1245 = vld [vmem:[%s0] sm:$0x1]
    %v1246 = vlaneseq
    %v1247 = vshrl.u32 %v1246, 7
    %v1248 = vadd.s32 %v1247, 8
    %v1249 = vlaneseq
    %v1250 = vshrl.u32 %v1249, 7
    %v1251 = vsub.s32 0, %v1250
    %v1252 = vrot.slane %v1245, %v1251
    %vm1253 = vcmp.eq.s32.totalorder %v1247, %v1252
    %vm1254 = vcmp.eq.s32.totalorder %v1248, %v1252
    %v1255 = vsel %vm1253, 1, 0
    %v1256 = vsel %vm1254, 1, 0
    %v1257 = vcvt.s32.f32 %v1255
    %v1258 = vcvt.s32.f32 %v1256
    %v1259 = vpack.c.bf16 %v1258, %v1257
    %v1260 = vld [vmem:[#allocation2] sm:$0xff]
    %v1261 = vld [vmem:[#allocation2 + $0x8] sm:$0xff]
    %v1262 = vld [vmem:[#allocation3] sm:$0xff]
    %v1263 = vld [vmem:[#allocation3 + $0x8] sm:$0xff]
    %v1264 = vld [vmem:[#allocation3 + $0x10] sm:$0xff]
    %v1265 = vld [vmem:[#allocation3 + $0x18] sm:$0xff]
    %v1266 = vld [vmem:[#allocation3 + $0x20] sm:$0xff]
    %v1267 = vld [vmem:[#allocation3 + $0x28] sm:$0xff]
    %v1268 = vld [vmem:[#allocation3 + $0x30] sm:$0xff]
    %v1269 = vld [vmem:[#allocation3 + $0x38] sm:$0xff]
    %1270 = vmatprep.subr.bf16.mxu0 0
    %1271 = vmatpush1.bf16.msra.mxu0 %v1262
    %1272 = vmatprep.subr.bf16.mxu0 0
    %1273 = vmatpush1.bf16.msra.mxu0 %v1263
    %1274 = vmatprep.subr.bf16.mxu0 0
    %1275 = vmatpush1.bf16.msra.mxu0 %v1264
    %1276 = vmatprep.subr.bf16.mxu0 0
    %1277 = vmatpush1.bf16.msra.mxu0 %v1265
    %1278 = vmatprep.subr.bf16.mxu0 0
    %1279 = vmatpush1.bf16.msra.mxu0 %v1266
    %1280 = vmatprep.subr.bf16.mxu0 0
    %1281 = vmatpush1.bf16.msra.mxu0 %v1267
    %1282 = vmatprep.subr.bf16.mxu0 0
    %1283 = vmatpush1.bf16.msra.mxu0 %v1268
    %1284 = vmatprep.subr.bf16.mxu0 0
    %1285 = vmatpush1.bf16.msra.mxu0 %v1269
    %1286 = vmatprep.subr.bf16.mxu0 0
    %1287 = vmatpush1.bf16.msra.mxu0 0
    %1288 = vmatprep.subr.bf16.mxu0 0
    %1289 = vmatpush1.bf16.msra.mxu0 0
    %1290 = vmatprep.subr.bf16.mxu0 0
    %1291 = vmatpush1.bf16.msra.mxu0 0
    %1292 = vmatprep.subr.bf16.mxu0 0
    %1293 = vmatpush1.bf16.msra.mxu0 0
    %1294 = vmatprep.subr.bf16.mxu0 0
    %1295 = vmatpush1.bf16.msra.mxu0 0
    %1296 = vmatprep.subr.bf16.mxu0 0
    %1297 = vmatpush1.bf16.msra.mxu0 0
    %1298 = vmatprep.subr.bf16.mxu0 0
    %1299 = vmatpush1.bf16.msra.mxu0 0
    %1300 = vmatprep.subr.bf16.mxu0 0
    %1301 = vmatpush1.bf16.msra.mxu0 0
    %1302 = vmatprep.mubr.bf16.mxu0 0
    %1303 = vmatmul.mubr.bf16.gmra.mrb[0].mxu0 %v1259
    %v1304 = vpop.f32.mrb[0].mxu0
    %v1305 = vadd.f32 0.0, %v1304
    %v1306 = vpop.f32.mrb[0].mxu0
    %v1307 = vpop.f32.mrb[0].mxu0
    %v1308 = vadd.f32 0.0, %v1307
    %v1309 = vpop.f32.mrb[0].mxu0
    %1310 = vdwg.mxu0
    %v1311 = vadd.f32 %v1260, %v1305
    %v1312 = vadd.f32 %v1261, %v1308
    %vm1313 = vcmask 285696
    %1314 = vst.msk [vmem:[#allocation2] sm:$0xff] %vm1313, %v1311
    %1315 = vst.msk [vmem:[#allocation2 + $0x8] sm:$0xff] %vm1313, %v1312
    // Predicated region
    $region82: #{tpu_custom_call.1} parent=1 // pred_check
      %p1316 = pneg %p66
    $region83: #{tpu_custom_call.1} parent=1 // pred_check_branch
      %1318 = sbr.rel (%p1316) target = $region85
    $region84: #{tpu_custom_call.1} parent=1 // pred_region
      %v1319 = vld [vmem:[#allocation2] sm:$0xff]
      %v1320 = vld [vmem:[#allocation2 + $0x8] sm:$0xff]
      %v1321 = vld [vmem:[%s12] sm:$0xff]
      %v1322 = vld [vmem:[%s12 + $0x8] sm:$0xff]
      %1324 = vset.pattern.permute.xlu0 0
      %1325 = vperm.xlu0 %1324, %v1321
      %v1326 = vpop.permute.xlu0 %1325
      %1329 = vset.pattern.permute.xlu0 0
      %1330 = vperm.xlu0 %1329, %v1322
      %v1331 = vpop.permute.xlu0 %1330
      %v1333 = vmul.f32 %v1319, %v1326
      %v1334 = vmul.f32 %v1320, %v1331
      %1337 = vrot.lane.b32.xlu0 %v1333, 96
      %v1338 = vpop.permute.xlu0 %1337
      %1339 = vrot.lane.b32.xlu0 %v1334, 96
      %v1340 = vpop.permute.xlu0 %1339
      %vm1343 = vcmask 23552
      %1344 = vst.msk [vmem:[%s20] sm:$0xff] %vm1343, %v1338
      %1345 = vst.msk [vmem:[%s20 + $0x8] sm:$0xff] %vm1343, %v1340
      %v1346 = vld [vmem:[%s13] sm:$0xff]
      %v1347 = vld [vmem:[%s13 + $0x8] sm:$0xff]
      %v1348 = vpack.c.bf16 %v1347, %v1346
      %v1349 = vld [vmem:[%s14] sm:$0xf]
      %v1350 = vld [vmem:[%s14 + $0x4] sm:$0xf]
      %v1351 = vld [vmem:[%s14 + $0x8] sm:$0xf]
      %v1352 = vld [vmem:[%s14 + $0xc] sm:$0xf]
      %v1353 = vpack.c.bf16 %v1320, %v1319
      %v1354 = vld [vmem:[%s15] sm:$0xf]
      %v1355 = vld [vmem:[%s15 + $0x4] sm:$0xf]
      %v1356 = vld [vmem:[%s15 + $0x8] sm:$0xf]
      %v1357 = vld [vmem:[%s15 + $0xc] sm:$0xf]
      %v1362 = vunpack.c.l.b16 %v1354
      %v1363 = vunpack.c.l.b16 %v1355
      %v1364 = vunpack.c.l.b16 %v1356
      %v1365 = vunpack.c.l.b16 %v1357
      %v1366 = vpack.c.b16 %v1363, %v1362
      %v1367 = vpack.c.b16 %v1365, %v1364
      %v1371 = vsel %vm763, %v1353, 0
      %1373 = vmatprep.subr.bf16.mxu0 0
      %1374 = vmatpush1.bf16.msra.mxu0 %v1366
      %1375 = vmatprep.subr.bf16.mxu0 0
      %1376 = vmatpush1.bf16.msra.mxu0 %v1367
      %1377 = vmatprep.subr.bf16.mxu0 0
      %1378 = vmatpush1.bf16.msra.mxu0 0
      %1379 = vmatprep.subr.bf16.mxu0 0
      %1380 = vmatpush1.bf16.msra.mxu0 0
      %1381 = vmatprep.subr.bf16.mxu0 0
      %1382 = vmatpush1.bf16.msra.mxu0 0
      %1383 = vmatprep.subr.bf16.mxu0 0
      %1384 = vmatpush1.bf16.msra.mxu0 0
      %1385 = vmatprep.subr.bf16.mxu0 0
      %1386 = vmatpush1.bf16.msra.mxu0 0
      %1387 = vmatprep.subr.bf16.mxu0 0
      %1388 = vmatpush1.bf16.msra.mxu0 0
      %1389 = vmatprep.subr.bf16.mxu0 0
      %1390 = vmatpush1.bf16.msra.mxu0 0
      %1391 = vmatprep.subr.bf16.mxu0 0
      %1392 = vmatpush1.bf16.msra.mxu0 0
      %1393 = vmatprep.subr.bf16.mxu0 0
      %1394 = vmatpush1.bf16.msra.mxu0 0
      %1395 = vmatprep.subr.bf16.mxu0 0
      %1396 = vmatpush1.bf16.msra.mxu0 0
      %1397 = vmatprep.subr.bf16.mxu0 0
      %1398 = vmatpush1.bf16.msra.mxu0 0
      %1399 = vmatprep.subr.bf16.mxu0 0
      %1400 = vmatpush1.bf16.msra.mxu0 0
      %1401 = vmatprep.subr.bf16.mxu0 0
      %1402 = vmatpush1.bf16.msra.mxu0 0
      %1403 = vmatprep.subr.bf16.mxu0 0
      %1404 = vmatpush1.bf16.msra.mxu0 0
      %1405 = vmatprep.mubr.bf16.mxu0 0
      %1406 = vmatmul.mubr.bf16.gmra.mrb[0].mxu0 %v1371
      %v1407 = vpop.f32.mrb[0].mxu0
      %v1408 = vadd.f32 0.0, %v1407
      %v1409 = vpop.f32.mrb[0].mxu0
      %v1410 = vpop.f32.mrb[0].mxu0
      %v1411 = vadd.f32 0.0, %v1410
      %v1412 = vpop.f32.mrb[0].mxu0
      %1413 = vdwg.mxu0
      %v1418 = vunpack.c.l.b16 %v1349
      %v1419 = vunpack.c.l.b16 %v1350
      %v1420 = vunpack.c.l.b16 %v1351
      %v1421 = vunpack.c.l.b16 %v1352
      %v1422 = vpack.c.b16 %v1419, %v1418
      %v1423 = vpack.c.b16 %v1421, %v1420
      %v1427 = vsel %vm763, %v1348, 0
      %1429 = vmatprep.subr.bf16.mxu0 0
      %1430 = vmatpush1.bf16.msra.mxu0 %v1422
      %1431 = vmatprep.subr.bf16.mxu0 0
      %1432 = vmatpush1.bf16.msra.mxu0 %v1423
      %1433 = vmatprep.subr.bf16.mxu0 0
      %1434 = vmatpush1.bf16.msra.mxu0 0
      %1435 = vmatprep.subr.bf16.mxu0 0
      %1436 = vmatpush1.bf16.msra.mxu0 0
      %1437 = vmatprep.subr.bf16.mxu0 0
      %1438 = vmatpush1.bf16.msra.mxu0 0
      %1439 = vmatprep.subr.bf16.mxu0 0
      %1440 = vmatpush1.bf16.msra.mxu0 0
      %1441 = vmatprep.subr.bf16.mxu0 0
      %1442 = vmatpush1.bf16.msra.mxu0 0
      %1443 = vmatprep.subr.bf16.mxu0 0
      %1444 = vmatpush1.bf16.msra.mxu0 0
      %1445 = vmatprep.subr.bf16.mxu0 0
      %1446 = vmatpush1.bf16.msra.mxu0 0
      %1447 = vmatprep.subr.bf16.mxu0 0
      %1448 = vmatpush1.bf16.msra.mxu0 0
      %1449 = vmatprep.subr.bf16.mxu0 0
      %1450 = vmatpush1.bf16.msra.mxu0 0
      %1451 = vmatprep.subr.bf16.mxu0 0
      %1452 = vmatpush1.bf16.msra.mxu0 0
      %1453 = vmatprep.subr.bf16.mxu0 0
      %1454 = vmatpush1.bf16.msra.mxu0 0
      %1455 = vmatprep.subr.bf16.mxu0 0
      %1456 = vmatpush1.bf16.msra.mxu0 0
      %1457 = vmatprep.subr.bf16.mxu0 0
      %1458 = vmatpush1.bf16.msra.mxu0 0
      %1459 = vmatprep.subr.bf16.mxu0 0
      %1460 = vmatpush1.bf16.msra.mxu0 0
      %1461 = vmatprep.mubr.bf16.mxu0 0
      %1462 = vmatmul.mubr.bf16.gmra.mrb[0].mxu0 %v1427
      %v1463 = vpop.f32.mrb[0].mxu0
      %v1464 = vadd.f32 %v1408, %v1463
      %v1465 = vpop.f32.mrb[0].mxu0
      %v1466 = vpop.f32.mrb[0].mxu0
      %v1467 = vadd.f32 %v1411, %v1466
      %v1468 = vpop.f32.mrb[0].mxu0
      %1469 = vdwg.mxu0
      %v1470 = vld [vmem:[%s16] sm:$0x1]
      %v1472 = vlaneseq
      %v1473 = vshrl.u32 %v1472, 7
      %v1474 = vsub.s32 0, %v1473
      %v1475 = vrot.slane %v1470, %v1474
      %v1477 = vadd.f32 %v1464, %v1475
      %v1478 = vadd.f32 %v1467, %v1475
      %v1479 = vmax.f32 %v1477, 0.0
      %v1480 = vmax.f32 %v1478, 0.0
      %v1481 = vpack.c.bf16 %v1480, %v1479
      %v1482 = vld [vmem:[%s17] sm:$0xf]
      %v1483 = vld [vmem:[%s17 + $0x4] sm:$0xf]
      %v1484 = vld [vmem:[%s17 + $0x8] sm:$0xf]
      %v1485 = vld [vmem:[%s17 + $0xc] sm:$0xf]
      %v1490 = vunpack.c.l.b16 %v1482
      %v1491 = vunpack.c.l.b16 %v1483
      %v1492 = vunpack.c.l.b16 %v1484
      %v1493 = vunpack.c.l.b16 %v1485
      %v1494 = vpack.c.b16 %v1491, %v1490
      %v1495 = vpack.c.b16 %v1493, %v1492
      %v1499 = vsel %vm763, %v1481, 0
      %1501 = vmatprep.subr.bf16.mxu0 0
      %1502 = vmatpush1.bf16.msra.mxu0 %v1494
      %1503 = vmatprep.subr.bf16.mxu0 0
      %1504 = vmatpush1.bf16.msra.mxu0 %v1495
      %1505 = vmatprep.subr.bf16.mxu0 0
      %1506 = vmatpush1.bf16.msra.mxu0 0
      %1507 = vmatprep.subr.bf16.mxu0 0
      %1508 = vmatpush1.bf16.msra.mxu0 0
      %1509 = vmatprep.subr.bf16.mxu0 0
      %1510 = vmatpush1.bf16.msra.mxu0 0
      %1511 = vmatprep.subr.bf16.mxu0 0
      %1512 = vmatpush1.bf16.msra.mxu0 0
      %1513 = vmatprep.subr.bf16.mxu0 0
      %1514 = vmatpush1.bf16.msra.mxu0 0
      %1515 = vmatprep.subr.bf16.mxu0 0
      %1516 = vmatpush1.bf16.msra.mxu0 0
      %1517 = vmatprep.subr.bf16.mxu0 0
      %1518 = vmatpush1.bf16.msra.mxu0 0
      %1519 = vmatprep.subr.bf16.mxu0 0
      %1520 = vmatpush1.bf16.msra.mxu0 0
      %1521 = vmatprep.subr.bf16.mxu0 0
      %1522 = vmatpush1.bf16.msra.mxu0 0
      %1523 = vmatprep.subr.bf16.mxu0 0
      %1524 = vmatpush1.bf16.msra.mxu0 0
      %1525 = vmatprep.subr.bf16.mxu0 0
      %1526 = vmatpush1.bf16.msra.mxu0 0
      %1527 = vmatprep.subr.bf16.mxu0 0
      %1528 = vmatpush1.bf16.msra.mxu0 0
      %1529 = vmatprep.subr.bf16.mxu0 0
      %1530 = vmatpush1.bf16.msra.mxu0 0
      %1531 = vmatprep.subr.bf16.mxu0 0
      %1532 = vmatpush1.bf16.msra.mxu0 0
      %1533 = vmatprep.mubr.bf16.mxu0 0
      %1534 = vmatmul.mubr.bf16.gmra.mrb[0].mxu0 %v1499
      %v1535 = vpop.f32.mrb[0].mxu0
      %v1536 = vadd.f32 0.0, %v1535
      %v1537 = vpop.f32.mrb[0].mxu0
      %v1538 = vpop.f32.mrb[0].mxu0
      %v1539 = vadd.f32 0.0, %v1538
      %v1540 = vpop.f32.mrb[0].mxu0
      %1541 = vdwg.mxu0
      %v1542 = vadd.f32 %v1346, %v1536
      %v1543 = vadd.f32 %v1347, %v1539
      %v1544 = vld [vmem:[%s18] sm:$0x1]
      %v1546 = vlaneseq
      %v1547 = vshrl.u32 %v1546, 7
      %v1548 = vsub.s32 0, %v1547
      %v1549 = vrot.slane %v1544, %v1548
      %v1551 = vadd.f32 %v1542, %v1549
      %v1552 = vadd.f32 %v1543, %v1549
      %1553 = vst.msk [vmem:[#allocation4] sm:$0xff] %vm763, %v1551
      %1554 = vst.msk [vmem:[#allocation4 + $0x8] sm:$0xff] %vm763, %v1552
    $region85: #{tpu_custom_call.1} parent=1 // pred_fallthru
      _
    // Predicated region
    $region86: #{tpu_custom_call.1} parent=1 // pred_check
      _
    $region87: #{tpu_custom_call.1} parent=1 // pred_check_branch
      %1556 = sbr.rel (0) target = $region89
    $region88: #{tpu_custom_call.1} parent=1 // pred_region
      %s1558 = ssub.s32 256, 256
      %1559 = vsyncadd [#allocation5], %s1558
      %s1560 = sshll.u32 [#allocation4], 4
      %s1561 = int_to_ptr.vmem [resolvable:$true] %s1560
      %1566 = dma.vmem_to_hbm [thread:$0]  %s1561, 256, %s19, [#allocation5], 128, 128, 8
    $region89: #{tpu_custom_call.1} parent=1 // pred_fallthru
      _
    // Predicated region
    $region90: #{tpu_custom_call.1} parent=1 // pred_check
      _
    $region91: #{tpu_custom_call.1} parent=1 // pred_check_branch
      %1568 = sbr.rel (0) target = $region93
    $region92: #{tpu_custom_call.1} parent=1 // pred_region
      _
    $region93: #{tpu_custom_call.1} parent=1 // pred_fallthru
      _
    // Predicated region
    $region94: #{tpu_custom_call.1} parent=1 // pred_check
      _
    $region95: #{tpu_custom_call.1} parent=1 // pred_check_branch
      %1570 = sbr.rel (0) target = $region97
    $region96: #{tpu_custom_call.1} parent=1 // pred_region
      %1571 = dma.done [#allocation5], 256
    $region97: #{tpu_custom_call.1} parent=1 // pred_fallthru
      _
    // Predicated region
    $region98: #{tpu_custom_call.1} parent=1 // pred_check
      _
    $region99: #{tpu_custom_call.1} parent=1 // pred_check_branch
      %1573 = sbr.rel (0) target = $region101
    $region100: #{tpu_custom_call.1} parent=1 // pred_region
      _
    $region101: #{tpu_custom_call.1} parent=1 // pred_fallthru
      _
    %1574 = vsyncpa [#allocation5], 1

</llo_original>
